<compile_context>
chip_gen: v7x
topology: tpu7x:2x2x1
jax: 0.10.0
libtpu: 0.0.40
codegen_flags: <defaults>
</compile_context>

<pallas_src>
import functools
import numpy as np

import jax
import jax.numpy as jnp
from jax import lax
from jax.experimental import pallas as pl
from jax.experimental.pallas import tpu as pltpu

F32_EPS = float(jnp.finfo(jnp.float32).eps)   # torch.nn.RMSNorm(eps=None) uses finfo.eps
F32_MAX = float(jnp.finfo(jnp.float32).max)
MASK_VALUE = -0.7 * F32_MAX                   # large finite mask (exp underflows after row-max shift)

VMEM_LIMIT = 64 * 1024 * 1024                 # explicit budget; <= physical VMEM on v5e/v6e/v7x


def _rmsnorm(x, g):
    # x: (N, D), g: (1, D) -> x * rsqrt(mean(x^2) + eps) * g   (matches torch F.rms_norm)
    ms = jnp.mean(x * x, axis=-1, keepdims=True)
    return x * lax.rsqrt(ms + F32_EPS) * g


# ---------------------------------------------------------------------------
# Whole-stack kernel: grid = (batch, depth).  The activation lives in o_ref (VMEM) across
# the depth axis; weight refs are the current layer's slabs (depth-indexed BlockSpecs).
# ---------------------------------------------------------------------------
def _layer_stack_kernel(x_ref, cos_ref, sin_ref, final_g_ref,
                        attn_g_ref, wqkv_ref, wout_ref,
                        ff_g_ref, w1x_ref, b1x_ref, w1g_ref, b1g_ref,
                        w2_ref, b2_ref,
                        o_ref, *, heads, dim_head):
    d = pl.program_id(1)
    n_layers = pl.num_programs(1)

    @pl.when(d == 0)
    def _():                                   # start of a new batch row: load the embedding
        o_ref[...] = x_ref[...]

    x = o_ref[...]                             # (N, D) f32, resident across the depth axis
    n = x.shape[0]
    half = dim_head // 2

    # ---------------- attention sub-block ----------------
    normed = _rmsnorm(x, attn_g_ref[...]).astype(jnp.bfloat16)
    qkv = jnp.dot(normed, wqkv_ref[...], preferred_element_type=jnp.float32)   # (N, 3*H*Dh)

    def heads_of(which):                       # -> (H, N, Dh): heads become a batch axis
        return jnp.stack(
            [qkv[:, (which * heads + h) * dim_head:(which * heads + h + 1) * dim_head]
             for h in range(heads)], axis=0)

    q3, k3, v3 = heads_of(0), heads_of(1), heads_of(2)

    cos = cos_ref[...][None]                   # (1, N, Dh) broadcast over heads
    sin = sin_ref[...][None]

    def rot_half(t):                           # one slice-pair + concat for ALL heads at once
        return jnp.concatenate([-t[..., half:], t[..., :half]], axis=-1)

    # scale (dim_head**-0.5) already folded into the q columns of wqkv host-side
    q3 = q3 * cos + rot_half(q3) * sin
    k3 = k3 * cos + rot_half(k3) * sin

    row = lax.broadcasted_iota(jnp.int32, (n, n), 0)
    col = lax.broadcasted_iota(jnp.int32, (n, n), 1)
    causal = (col > row)[None]                 # (1, N, N) strictly-upper mask

    # batched (over heads) score / PV matmuls; bf16 MXU operands, f32 accumulation
    s = jnp.einsum('hnd,hmd->hnm', q3.astype(jnp.bfloat16), k3.astype(jnp.bfloat16),
                   preferred_element_type=jnp.float32)                          # (H, N, N)
    s = jnp.where(causal, MASK_VALUE, s)
    s = s - jnp.max(s, axis=-1, keepdims=True)
    e = jnp.exp(s)
    attn = e * pl.reciprocal(jnp.sum(e, axis=-1, keepdims=True), approx=True)
    o3 = jnp.einsum('hnm,hmd->hnd', attn.astype(jnp.bfloat16), v3.astype(jnp.bfloat16),
                    preferred_element_type=jnp.float32)                          # (H, N, Dh)

    o_cat = jnp.concatenate([o3[h] for h in range(heads)], axis=-1)              # (N, H*Dh)
    x = jnp.dot(o_cat.astype(jnp.bfloat16), wout_ref[...],
                preferred_element_type=jnp.float32) + x                          # out-proj + residual

    # ---------------- feedforward sub-block (GEGLU) ----------------
    normed = _rmsnorm(x, ff_g_ref[...]).astype(jnp.bfloat16)
    xp = jnp.dot(normed, w1x_ref[...], preferred_element_type=jnp.float32) + b1x_ref[...]
    gate = jnp.dot(normed, w1g_ref[...], preferred_element_type=jnp.float32) + b1g_ref[...]
    act = jax.nn.gelu(gate, approximate=True) * xp          # tanh gelu (review-recommended)
    x = jnp.dot(act.astype(jnp.bfloat16), w2_ref[...],
                preferred_element_type=jnp.float32) + b2_ref[...] + x            # residual

    o_ref[...] = x

    @pl.when(d == n_layers - 1)
    def _():                                   # fuse final RMSNorm into the last layer's write
        o_ref[...] = _rmsnorm(x, final_g_ref[...])


# ---------------------------------------------------------------------------
# Logits projection kernel (input is already final-normed): plain GEMM + bias,
# tiled over the vocab dimension with a large lane-dense tile.
# ---------------------------------------------------------------------------
def _logits_kernel(e_ref, wl_ref, bl_ref, o_ref):
    o_ref[...] = jnp.dot(e_ref[...].astype(jnp.bfloat16), wl_ref[...],
                         preferred_element_type=jnp.float32) + bl_ref[...]


# ---------------------------------------------------------------------------
# pallas_call wrappers
# ---------------------------------------------------------------------------
def transformer_stack(x, cos, sin, prep, *, heads, dim_head):
    B, N, D = x.shape
    depth = prep["wqkv"].shape[0]
    kernel = functools.partial(_layer_stack_kernel, heads=heads, dim_head=dim_head)

    def wspec(arr):    # depth-indexed weight slab (prefetched across the depth grid axis)
        return pl.BlockSpec((pl.Squeezed(),) + arr.shape[1:], lambda b, d: (d, 0, 0))

    def rspec(arr):    # small replicated array (rotary tables, final gain)
        return pl.BlockSpec(arr.shape, lambda b, d: (0,) * arr.ndim)

    act_spec = pl.BlockSpec((pl.Squeezed(), N, D), lambda b, d: (b, 0, 0))

    return pl.pallas_call(
        kernel,
        out_shape=jax.ShapeDtypeStruct((B, N, D), jnp.float32),
        grid=(B, depth),
        in_specs=[
            act_spec, rspec(cos), rspec(sin), rspec(prep["final_g"]),
            wspec(prep["attn_g"]), wspec(prep["wqkv"]), wspec(prep["wout"]),
            wspec(prep["ff_g"]), wspec(prep["w1x"]), wspec(prep["b1x"]),
            wspec(prep["w1g"]), wspec(prep["b1g"]), wspec(prep["w2"]), wspec(prep["b2"]),
        ],
        out_specs=act_spec,
        compiler_params=pltpu.CompilerParams(
            dimension_semantics=("parallel", "arbitrary"),
            vmem_limit_bytes=VMEM_LIMIT),
    )(x, cos, sin, prep["final_g"],
      prep["attn_g"], prep["wqkv"], prep["wout"],
      prep["ff_g"], prep["w1x"], prep["b1x"], prep["w1g"], prep["b1g"],
      prep["w2"], prep["b2"])


def final_logits(embed, wl, bl, *, v_tile=512):
    B, N, D = embed.shape
    V = wl.shape[1]
    v_tile = min(v_tile, V)
    if V % v_tile != 0:
        v_tile = V       # TODO(synk): pad the vocab to a multiple of 128 for production vocabs
    return pl.pallas_call(
        _logits_kernel,
        out_shape=jax.ShapeDtypeStruct((B, N, V), jnp.float32),
        grid=(B, V // v_tile),
        in_specs=[
            pl.BlockSpec((pl.Squeezed(), N, D), lambda b, v: (b, 0, 0)),  # resident across v
            pl.BlockSpec((D, v_tile), lambda b, v: (0, v)),
            pl.BlockSpec((1, v_tile), lambda b, v: (0, v)),
        ],
        out_specs=pl.BlockSpec((pl.Squeezed(), N, v_tile), lambda b, v: (b, 0, v)),
        compiler_params=pltpu.CompilerParams(
            dimension_semantics=("parallel", "parallel"),
            vmem_limit_bytes=VMEM_LIMIT),
    )(embed, wl, bl)


# ---------------------------------------------------------------------------
# Glue: parameters, rotary tables, weight prep, full forward
# ---------------------------------------------------------------------------
def rotary_tables(seq_len, dim_head, theta=10000.0):
    inv_freq = theta ** -(jnp.arange(0, dim_head, 2, dtype=jnp.float32) / dim_head)
    t = jnp.arange(seq_len, dtype=jnp.float32)
    freqs = t[:, None] * inv_freq[None, :]
    pos = jnp.concatenate([freqs, freqs], axis=-1)           # (N, Dh)
    return jnp.cos(pos), jnp.sin(pos)


def make_params(key, *, num_tokens, dim, depth, dim_head, heads, ff_mult):
    dim_attn = dim_head * heads
    dim_ff = int(dim * ff_mult * 2 / 3)

    def nrm(k, shape, scale=0.02):
        return (jax.random.normal(k, shape, jnp.float32) * scale).astype(jnp.float32)

    keys = iter(jax.random.split(key, 4 + depth * 8))
    params = {
        "token_emb": nrm(next(keys), (num_tokens, dim)),
        "layers": [],
        "final_g": jnp.ones((1, dim), jnp.float32),
        "w_logits": nrm(next(keys), (dim, num_tokens)),
        "b_logits": nrm(next(keys), (1, num_tokens)),
    }
    for _ in range(depth):
        params["layers"].append(dict(
            attn_g=jnp.ones((1, dim), jnp.float32),
            wqkv=nrm(next(keys), (dim, 3 * dim_attn)),
            wout=nrm(next(keys), (dim_attn, dim)),
            ff_g=jnp.ones((1, dim), jnp.float32),
            w1=nrm(next(keys), (dim, 2 * dim_ff)),
            b1=nrm(next(keys), (1, 2 * dim_ff)),
            w2=nrm(next(keys), (dim_ff, dim)),
            b2=nrm(next(keys), (1, dim)),
        ))
    return params


def prepare_weights(params, *, heads, dim_head):
    """Stack per-layer weights along depth, split GEGLU weights, fold q-scale, cast MXU
    operands to bf16 (biases / gains stay f32 - they add to f32 accumulators)."""
    hd = heads * dim_head
    L = params["layers"]

    def stk(name):
        return jnp.stack([lp[name] for lp in L], axis=0)

    wqkv = stk("wqkv")
    wqkv = wqkv.at[:, :, :hd].multiply(dim_head ** -0.5)   # fold q scale (commutes with rotary)
    w1, b1 = stk("w1"), stk("b1")
    dff = L[0]["w2"].shape[0]
    return dict(
        wqkv=wqkv.astype(jnp.bfloat16),
        wout=stk("wout").astype(jnp.bfloat16),
        attn_g=stk("attn_g"),
        ff_g=stk("ff_g"),
        w1x=w1[:, :, :dff].astype(jnp.bfloat16),
        w1g=w1[:, :, dff:].astype(jnp.bfloat16),
        b1x=b1[:, :, :dff],
        b1g=b1[:, :, dff:],
        w2=stk("w2").astype(jnp.bfloat16),
        b2=stk("b2"),
        final_g=params["final_g"],
        w_logits=params["w_logits"].astype(jnp.bfloat16),
        b_logits=params["b_logits"],
    )


def llama_forward(params, tokens, *, heads, dim_head, v_tile=512):
    # return_q_values defaults to False, so the forward returns logits only.
    prep = prepare_weights(params, heads=heads, dim_head=dim_head)
    x = params["token_emb"][tokens].astype(jnp.float32)       # embedding gather (plain-JAX glue)
    cos, sin = rotary_tables(tokens.shape[-1], dim_head)
    embed = transformer_stack(x, cos, sin, prep, heads=heads, dim_head=dim_head)  # final-normed
    return final_logits(embed, prep["w_logits"], prep["b_logits"], v_tile=v_tile)


# ---------------------------------------------------------------------------
# Pure-JAX f32 reference (same math as the torch module) for a correctness check
# ---------------------------------------------------------------------------
def reference_forward(params, tokens, *, heads, dim_head):
    x = params["token_emb"][tokens].astype(jnp.float32)
    B, N, D = x.shape
    cos, sin = rotary_tables(N, dim_head)
    scale = dim_head ** -0.5
    causal = jnp.triu(jnp.ones((N, N), dtype=bool), 1)

    def rms(t, g):
        return t * lax.rsqrt(jnp.mean(t * t, -1, keepdims=True) + F32_EPS) * g

    def rotate_half(t):
        d = t.shape[-1]
        x1, x2 = t[..., :d // 2], t[..., d // 2:]
        return jnp.concatenate([-x2, x1], axis=-1)

    for lp in params["layers"]:
        normed = rms(x, lp["attn_g"])
        qkv = (normed @ lp["wqkv"]).reshape(B, N, 3, heads, dim_head)
        q, k, v = [qkv[:, :, i].transpose(0, 2, 1, 3) for i in range(3)]   # (B,H,N,Dh)
        rot = lambda t: t * cos + rotate_half(t) * sin
        q, k = rot(q), rot(k)
        q = q * scale
        sim = jnp.einsum("bhid,bhjd->bhij", q, k)
        sim = jnp.where(causal, -F32_MAX, sim)
        attn = jax.nn.softmax(sim, axis=-1)
        out = jnp.einsum("bhij,bhjd->bhid", attn, v)
        out = out.transpose(0, 2, 1, 3).reshape(B, N, heads * dim_head)
        x = out @ lp["wout"] + x
        normed = rms(x, lp["ff_g"])
        h = normed @ lp["w1"] + lp["b1"]
        dff = lp["w2"].shape[0]
        xp, gate = h[..., :dff], h[..., dff:]
        x = (jax.nn.gelu(gate, approximate=False) * xp) @ lp["w2"] + lp["b2"] + x
    embed = rms(x, params["final_g"])
    return embed @ params["w_logits"] + params["b_logits"]


if __name__ == "__main__":
    num_tokens, dim, depth, heads, dim_head, ff_mult = 256, 48, 2, 4, 16, 4
    B, N = 2, 8

    key = jax.random.PRNGKey(0)
    pkey, tkey = jax.random.split(key)
    params = make_params(pkey, num_tokens=num_tokens, dim=dim, depth=depth,
                         dim_head=dim_head, heads=heads, ff_mult=ff_mult)
    tokens = jax.random.randint(tkey, (B, N), 0, num_tokens, dtype=jnp.int32)

    logits = llama_forward(params, tokens, heads=heads, dim_head=dim_head)
    logits = jax.block_until_ready(logits)
    assert logits.shape == (B, N, num_tokens)

    # f32 reference; tolerance loosened to cover bf16 MXU operands / approx reciprocal /
    # tanh-gelu (accumulation stays f32 via preferred_element_type).
    ref = jax.block_until_ready(reference_forward(params, tokens, heads=heads, dim_head=dim_head))
    np.testing.assert_allclose(np.asarray(logits), np.asarray(ref), rtol=5e-2, atol=1e-2)

    print("KERNEL_OK")
</pallas_src>

<mosaic_0001>
module attributes {stable_mosaic.version = 11 : i64} {
  func.func @_layer_stack_kernel(%arg0: i32, %arg1: i32, %arg2: memref<1x8x48xf32, #tpu.memory_space<vmem>>, %arg3: memref<8x16xf32, #tpu.memory_space<vmem>>, %arg4: memref<8x16xf32, #tpu.memory_space<vmem>>, %arg5: memref<1x48xf32, #tpu.memory_space<vmem>>, %arg6: memref<1x1x48xf32, #tpu.memory_space<vmem>>, %arg7: memref<1x48x192xbf16, #tpu.memory_space<vmem>>, %arg8: memref<1x64x48xbf16, #tpu.memory_space<vmem>>, %arg9: memref<1x1x48xf32, #tpu.memory_space<vmem>>, %arg10: memref<1x48x128xbf16, #tpu.memory_space<vmem>>, %arg11: memref<1x1x128xf32, #tpu.memory_space<vmem>>, %arg12: memref<1x48x128xbf16, #tpu.memory_space<vmem>>, %arg13: memref<1x1x128xf32, #tpu.memory_space<vmem>>, %arg14: memref<1x128x48xbf16, #tpu.memory_space<vmem>>, %arg15: memref<1x1x48xf32, #tpu.memory_space<vmem>>, %arg16: memref<1x8x48xf32, #tpu.memory_space<vmem>>) attributes {dimension_semantics = [#tpu.dimension_semantics<parallel>, #tpu.dimension_semantics<arbitrary>], iteration_bounds = array<i64: 2, 2>, scalar_prefetch = 0 : i64, scratch_operands = 0 : i64, tpu.core_type = #tpu.core_type<tc>, window_params = [{transform_indices = @transform_0, window_bounds = array<i64: 1, 8, 48>}, {pipeline_mode = #tpu.pipeline_mode<synchronous>, transform_indices = @transform_1, window_bounds = array<i64: 8, 16>}, {pipeline_mode = #tpu.pipeline_mode<synchronous>, transform_indices = @transform_2, window_bounds = array<i64: 8, 16>}, {pipeline_mode = #tpu.pipeline_mode<synchronous>, transform_indices = @transform_3, window_bounds = array<i64: 1, 48>}, {transform_indices = @transform_4, window_bounds = array<i64: 1, 1, 48>}, {transform_indices = @transform_5, window_bounds = array<i64: 1, 48, 192>}, {transform_indices = @transform_6, window_bounds = array<i64: 1, 64, 48>}, {transform_indices = @transform_7, window_bounds = array<i64: 1, 1, 48>}, {transform_indices = @transform_8, window_bounds = array<i64: 1, 48, 128>}, {transform_indices = @transform_9, window_bounds = array<i64: 1, 1, 128>}, {transform_indices = @transform_10, window_bounds = array<i64: 1, 48, 128>}, {transform_indices = @transform_11, window_bounds = array<i64: 1, 1, 128>}, {transform_indices = @transform_12, window_bounds = array<i64: 1, 128, 48>}, {transform_indices = @transform_13, window_bounds = array<i64: 1, 1, 48>}, {transform_indices = @transform_14, window_bounds = array<i64: 1, 8, 48>}]} {
    %c0_i32 = arith.constant 0 : i32
    %0 = arith.cmpi eq, %arg1, %c0_i32 : i32
    %1 = arith.extui %0 : i1 to i32
    %c0_i32_0 = arith.constant 0 : i32
    %2 = arith.cmpi ne, %1, %c0_i32_0 : i32
    scf.if %2 {
      %c0_62 = arith.constant 0 : index
      %c0_63 = arith.constant 0 : index
      %c0_64 = arith.constant 0 : index
      %170 = vector.load %arg2[%c0_62, %c0_63, %c0_64] : memref<1x8x48xf32, #tpu.memory_space<vmem>>, vector<1x8x48xf32>
      %171 = vector.shape_cast %170 : vector<1x8x48xf32> to vector<8x48xf32>
      %c0_65 = arith.constant 0 : index
      %c0_66 = arith.constant 0 : index
      %c0_67 = arith.constant 0 : index
      %172 = vector.load %arg16[%c0_65, %c0_66, %c0_67] : memref<1x8x48xf32, #tpu.memory_space<vmem>>, vector<1x8x48xf32>
      %173 = vector.shape_cast %172 : vector<1x8x48xf32> to vector<8x48xf32>
      %174 = vector.shape_cast %171 : vector<8x48xf32> to vector<1x8x48xf32>
      tpu.vector_store %arg16[%c0_65, %c0_66, %c0_67], %174 {strides = array<i32>} : memref<1x8x48xf32, #tpu.memory_space<vmem>>, vector<1x8x48xf32>,
    } else {
    }
    %c0 = arith.constant 0 : index
    %c0_1 = arith.constant 0 : index
    %c0_2 = arith.constant 0 : index
    %3 = vector.load %arg16[%c0, %c0_1, %c0_2] : memref<1x8x48xf32, #tpu.memory_space<vmem>>, vector<1x8x48xf32>
    %4 = vector.shape_cast %3 : vector<1x8x48xf32> to vector<8x48xf32>
    %c0_3 = arith.constant 0 : index
    %c0_4 = arith.constant 0 : index
    %c0_5 = arith.constant 0 : index
    %5 = vector.load %arg6[%c0_3, %c0_4, %c0_5] : memref<1x1x48xf32, #tpu.memory_space<vmem>>, vector<1x1x48xf32>
    %6 = vector.shape_cast %5 : vector<1x1x48xf32> to vector<1x48xf32>
    %7 = arith.mulf %4, %4 : vector<8x48xf32>
    %cst = arith.constant dense<0.000000e+00> : vector<8xf32>
    %8 = vector.multi_reduction <add>, %7, %cst [1] : vector<8x48xf32> to vector<8xf32>
    %9 = vector.shape_cast %8 : vector<8xf32> to vector<8x1xf32>
    %cst_6 = arith.constant 4.800000e+01 : f32
    %10 = vector.broadcast %cst_6 : f32 to vector<8x1xf32>
    %11 = arith.divf %9, %10 : vector<8x1xf32>
    %cst_7 = arith.constant 1.1920929E-7 : f32
    %12 = vector.broadcast %cst_7 : f32 to vector<8x1xf32>
    %13 = arith.addf %11, %12 : vector<8x1xf32>
    %14 = math.rsqrt %13 : vector<8x1xf32>
    %15 = vector.broadcast %14 : vector<8x1xf32> to vector<8x48xf32>
    %16 = arith.mulf %4, %15 : vector<8x48xf32>
    %17 = vector.broadcast %6 : vector<1x48xf32> to vector<8x48xf32>
    %18 = arith.mulf %16, %17 : vector<8x48xf32>
    %19 = arith.truncf %18 : vector<8x48xf32> to vector<8x48xbf16>
    %c0_8 = arith.constant 0 : index
    %c0_9 = arith.constant 0 : index
    %c0_10 = arith.constant 0 : index
    %20 = vector.load %arg7[%c0_8, %c0_9, %c0_10] : memref<1x48x192xbf16, #tpu.memory_space<vmem>>, vector<1x48x192xbf16>
    %21 = vector.shape_cast %20 : vector<1x48x192xbf16> to vector<48x192xbf16>
    %cst_11 = arith.constant dense<0.000000e+00> : vector<8x192xf32>
    %22 = tpu.matmul %19, %21, %cst_11 {dimension_numbers = #tpu.dot_dimension_numbers<[1], [0], [0], [1], [0, 0, 1, 1], [], []>} : vector<8x48xbf16>, vector<48x192xbf16>, vector<8x192xf32> -> vector<8x192xf32>
    %23 = vector.extract_strided_slice %22 {offsets = [0, 0], sizes = [8, 16], strides = [1, 1]} : vector<8x192xf32> to vector<8x16xf32>
    %24 = vector.extract_strided_slice %22 {offsets = [0, 16], sizes = [8, 16], strides = [1, 1]} : vector<8x192xf32> to vector<8x16xf32>
    %25 = vector.extract_strided_slice %22 {offsets = [0, 32], sizes = [8, 16], strides = [1, 1]} : vector<8x192xf32> to vector<8x16xf32>
    %26 = vector.extract_strided_slice %22 {offsets = [0, 48], sizes = [8, 16], strides = [1, 1]} : vector<8x192xf32> to vector<8x16xf32>
    %27 = vector.shape_cast %23 : vector<8x16xf32> to vector<1x8x16xf32>
    %28 = vector.shape_cast %24 : vector<8x16xf32> to vector<1x8x16xf32>
    %29 = vector.shape_cast %25 : vector<8x16xf32> to vector<1x8x16xf32>
    %30 = vector.shape_cast %26 : vector<8x16xf32> to vector<1x8x16xf32>
    %31 = tpu.concatenate %27, %28, %29, %30 in 0 : vector<1x8x16xf32>, vector<1x8x16xf32>, vector<1x8x16xf32>, vector<1x8x16xf32> -> vector<4x8x16xf32>
    %32 = vector.extract_strided_slice %22 {offsets = [0, 64], sizes = [8, 16], strides = [1, 1]} : vector<8x192xf32> to vector<8x16xf32>
    %33 = vector.extract_strided_slice %22 {offsets = [0, 80], sizes = [8, 16], strides = [1, 1]} : vector<8x192xf32> to vector<8x16xf32>
    %34 = vector.extract_strided_slice %22 {offsets = [0, 96], sizes = [8, 16], strides = [1, 1]} : vector<8x192xf32> to vector<8x16xf32>
    %35 = vector.extract_strided_slice %22 {offsets = [0, 112], sizes = [8, 16], strides = [1, 1]} : vector<8x192xf32> to vector<8x16xf32>
    %36 = vector.shape_cast %32 : vector<8x16xf32> to vector<1x8x16xf32>
    %37 = vector.shape_cast %33 : vector<8x16xf32> to vector<1x8x16xf32>
    %38 = vector.shape_cast %34 : vector<8x16xf32> to vector<1x8x16xf32>
    %39 = vector.shape_cast %35 : vector<8x16xf32> to vector<1x8x16xf32>
    %40 = tpu.concatenate %36, %37, %38, %39 in 0 : vector<1x8x16xf32>, vector<1x8x16xf32>, vector<1x8x16xf32>, vector<1x8x16xf32> -> vector<4x8x16xf32>
    %41 = vector.extract_strided_slice %22 {offsets = [0, 128], sizes = [8, 16], strides = [1, 1]} : vector<8x192xf32> to vector<8x16xf32>
    %42 = vector.extract_strided_slice %22 {offsets = [0, 144], sizes = [8, 16], strides = [1, 1]} : vector<8x192xf32> to vector<8x16xf32>
    %43 = vector.extract_strided_slice %22 {offsets = [0, 160], sizes = [8, 16], strides = [1, 1]} : vector<8x192xf32> to vector<8x16xf32>
    %44 = vector.extract_strided_slice %22 {offsets = [0, 176], sizes = [8, 16], strides = [1, 1]} : vector<8x192xf32> to vector<8x16xf32>
    %45 = vector.shape_cast %41 : vector<8x16xf32> to vector<1x8x16xf32>
    %46 = vector.shape_cast %42 : vector<8x16xf32> to vector<1x8x16xf32>
    %47 = vector.shape_cast %43 : vector<8x16xf32> to vector<1x8x16xf32>
    %48 = vector.shape_cast %44 : vector<8x16xf32> to vector<1x8x16xf32>
    %49 = tpu.concatenate %45, %46, %47, %48 in 0 : vector<1x8x16xf32>, vector<1x8x16xf32>, vector<1x8x16xf32>, vector<1x8x16xf32> -> vector<4x8x16xf32>
    %c0_12 = arith.constant 0 : index
    %c0_13 = arith.constant 0 : index
    %50 = vector.load %arg3[%c0_12, %c0_13] : memref<8x16xf32, #tpu.memory_space<vmem>>, vector<8x16xf32>
    %51 = vector.shape_cast %50 : vector<8x16xf32> to vector<1x8x16xf32>
    %c0_14 = arith.constant 0 : index
    %c0_15 = arith.constant 0 : index
    %52 = vector.load %arg4[%c0_14, %c0_15] : memref<8x16xf32, #tpu.memory_space<vmem>>, vector<8x16xf32>
    %53 = vector.shape_cast %52 : vector<8x16xf32> to vector<1x8x16xf32>
    %54 = vector.broadcast %51 : vector<1x8x16xf32> to vector<4x8x16xf32>
    %55 = arith.mulf %31, %54 : vector<4x8x16xf32>
    %56 = vector.extract_strided_slice %31 {offsets = [0, 0, 8], sizes = [4, 8, 8], strides = [1, 1, 1]} : vector<4x8x16xf32> to vector<4x8x8xf32>
    %cst_16 = arith.constant 0.000000e+00 : f32
    %57 = vector.broadcast %cst_16 : f32 to vector<4x8x8xf32>
    %58 = arith.subf %57, %56 : vector<4x8x8xf32>
    %59 = vector.extract_strided_slice %31 {offsets = [0, 0, 0], sizes = [4, 8, 8], strides = [1, 1, 1]} : vector<4x8x16xf32> to vector<4x8x8xf32>
    %60 = tpu.concatenate %58, %59 in 2 : vector<4x8x8xf32>, vector<4x8x8xf32> -> vector<4x8x16xf32>
    %61 = vector.broadcast %53 : vector<1x8x16xf32> to vector<4x8x16xf32>
    %62 = arith.mulf %60, %61 : vector<4x8x16xf32>
    %63 = arith.addf %55, %62 : vector<4x8x16xf32>
    %64 = vector.broadcast %51 : vector<1x8x16xf32> to vector<4x8x16xf32>
    %65 = arith.mulf %40, %64 : vector<4x8x16xf32>
    %66 = vector.extract_strided_slice %40 {offsets = [0, 0, 8], sizes = [4, 8, 8], strides = [1, 1, 1]} : vector<4x8x16xf32> to vector<4x8x8xf32>
    %cst_17 = arith.constant 0.000000e+00 : f32
    %67 = vector.broadcast %cst_17 : f32 to vector<4x8x8xf32>
    %68 = arith.subf %67, %66 : vector<4x8x8xf32>
    %69 = vector.extract_strided_slice %40 {offsets = [0, 0, 0], sizes = [4, 8, 8], strides = [1, 1, 1]} : vector<4x8x16xf32> to vector<4x8x8xf32>
    %70 = tpu.concatenate %68, %69 in 2 : vector<4x8x8xf32>, vector<4x8x8xf32> -> vector<4x8x16xf32>
    %71 = vector.broadcast %53 : vector<1x8x16xf32> to vector<4x8x16xf32>
    %72 = arith.mulf %70, %71 : vector<4x8x16xf32>
    %73 = arith.addf %65, %72 : vector<4x8x16xf32>
    %74 = tpu.iota {dimensions = array<i32: 0>} : vector<8x8xi32>
    %75 = tpu.iota {dimensions = array<i32: 1>} : vector<8x8xi32>
    %76 = arith.cmpi sgt, %75, %74 : vector<8x8xi32>
    %77 = vector.shape_cast %76 : vector<8x8xi1> to vector<1x8x8xi1>
    %78 = arith.truncf %63 : vector<4x8x16xf32> to vector<4x8x16xbf16>
    %79 = arith.truncf %73 : vector<4x8x16xf32> to vector<4x8x16xbf16>
    "tpu.trace_start"() <{level = 10 : i32, message = "hnd,hmd->hnm"}> : () -> ()
    %cst_18 = arith.constant dense<0.000000e+00> : vector<4x8x8xf32>
    %80 = tpu.matmul %78, %79, %cst_18 {dimension_numbers = #tpu.dot_dimension_numbers<[2], [2], [1], [1], [0, 0, 0, 1, 1, 1], [0], [0]>} : vector<4x8x16xbf16>, vector<4x8x16xbf16>, vector<4x8x8xf32> -> vector<4x8x8xf32>
    %cst_19 = arith.constant -2.38197633E+38 : f32
    "tpu.trace_stop"() : () -> ()
    %81 = vector.shape_cast %77 : vector<1x8x8xi1> to vector<1x8x8xi1>
    %82 = vector.broadcast %81 : vector<1x8x8xi1> to vector<4x8x8xi1>
    %83 = vector.broadcast %cst_19 : f32 to vector<4x8x8xf32>
    %84 = arith.select %82, %83, %80 : vector<4x8x8xi1>, vector<4x8x8xf32>
    %cst_20 = arith.constant dense<0xFF800000> : vector<4x8xf32>
    %85 = vector.multi_reduction <maximumf>, %84, %cst_20 [2] : vector<4x8x8xf32> to vector<4x8xf32>
    %86 = vector.shape_cast %85 : vector<4x8xf32> to vector<4x8x1xf32>
    %87 = vector.broadcast %86 : vector<4x8x1xf32> to vector<4x8x8xf32>
    %88 = arith.subf %84, %87 : vector<4x8x8xf32>
    %89 = math.exp %88 : vector<4x8x8xf32>
    %cst_21 = arith.constant dense<0.000000e+00> : vector<4x8xf32>
    %90 = vector.multi_reduction <add>, %89, %cst_21 [2] : vector<4x8x8xf32> to vector<4x8xf32>
    %91 = vector.shape_cast %90 : vector<4x8xf32> to vector<4x8x1xf32>
    %92 = tpu.reciprocal %91 {approx = true} : vector<4x8x1xf32> -> vector<4x8x1xf32>
    %93 = vector.broadcast %92 : vector<4x8x1xf32> to vector<4x8x8xf32>
    %94 = arith.mulf %89, %93 : vector<4x8x8xf32>
    %95 = arith.truncf %94 : vector<4x8x8xf32> to vector<4x8x8xbf16>
    %96 = arith.truncf %49 : vector<4x8x16xf32> to vector<4x8x16xbf16>
    "tpu.trace_start"() <{level = 10 : i32, message = "hnm,hmd->hnd"}> : () -> ()
    %cst_22 = arith.constant dense<0.000000e+00> : vector<4x8x16xf32>
    %97 = tpu.matmul %95, %96, %cst_22 {dimension_numbers = #tpu.dot_dimension_numbers<[2], [1], [1], [2], [0, 0, 0, 1, 1, 2], [0], [0]>} : vector<4x8x8xbf16>, vector<4x8x16xbf16>, vector<4x8x16xf32> -> vector<4x8x16xf32>
    "tpu.trace_stop"() : () -> ()
    %98 = vector.extract_strided_slice %97 {offsets = [0, 0, 0], sizes = [1, 8, 16], strides = [1, 1, 1]} : vector<4x8x16xf32> to vector<1x8x16xf32>
    %99 = vector.shape_cast %98 : vector<1x8x16xf32> to vector<8x16xf32>
    %100 = vector.extract_strided_slice %97 {offsets = [1, 0, 0], sizes = [1, 8, 16], strides = [1, 1, 1]} : vector<4x8x16xf32> to vector<1x8x16xf32>
    %101 = vector.shape_cast %100 : vector<1x8x16xf32> to vector<8x16xf32>
    %102 = vector.extract_strided_slice %97 {offsets = [2, 0, 0], sizes = [1, 8, 16], strides = [1, 1, 1]} : vector<4x8x16xf32> to vector<1x8x16xf32>
    %103 = vector.shape_cast %102 : vector<1x8x16xf32> to vector<8x16xf32>
    %104 = vector.extract_strided_slice %97 {offsets = [3, 0, 0], sizes = [1, 8, 16], strides = [1, 1, 1]} : vector<4x8x16xf32> to vector<1x8x16xf32>
    %105 = vector.shape_cast %104 : vector<1x8x16xf32> to vector<8x16xf32>
    %106 = tpu.concatenate %99, %101, %103, %105 in 1 : vector<8x16xf32>, vector<8x16xf32>, vector<8x16xf32>, vector<8x16xf32> -> vector<8x64xf32>
    %107 = arith.truncf %106 : vector<8x64xf32> to vector<8x64xbf16>
    %c0_23 = arith.constant 0 : index
    %c0_24 = arith.constant 0 : index
    %c0_25 = arith.constant 0 : index
    %108 = vector.load %arg8[%c0_23, %c0_24, %c0_25] : memref<1x64x48xbf16, #tpu.memory_space<vmem>>, vector<1x64x48xbf16>
    %109 = vector.shape_cast %108 : vector<1x64x48xbf16> to vector<64x48xbf16>
    %cst_26 = arith.constant dense<0.000000e+00> : vector<8x48xf32>
    %110 = tpu.matmul %107, %109, %cst_26 {dimension_numbers = #tpu.dot_dimension_numbers<[1], [0], [0], [1], [0, 0, 1, 1], [], []>} : vector<8x64xbf16>, vector<64x48xbf16>, vector<8x48xf32> -> vector<8x48xf32>
    %111 = arith.addf %110, %4 : vector<8x48xf32>
    %c0_27 = arith.constant 0 : index
    %c0_28 = arith.constant 0 : index
    %c0_29 = arith.constant 0 : index
    %112 = vector.load %arg9[%c0_27, %c0_28, %c0_29] : memref<1x1x48xf32, #tpu.memory_space<vmem>>, vector<1x1x48xf32>
    %113 = vector.shape_cast %112 : vector<1x1x48xf32> to vector<1x48xf32>
    %114 = arith.mulf %111, %111 : vector<8x48xf32>
    %cst_30 = arith.constant dense<0.000000e+00> : vector<8xf32>
    %115 = vector.multi_reduction <add>, %114, %cst_30 [1] : vector<8x48xf32> to vector<8xf32>
    %116 = vector.shape_cast %115 : vector<8xf32> to vector<8x1xf32>
    %cst_31 = arith.constant 4.800000e+01 : f32
    %117 = vector.broadcast %cst_31 : f32 to vector<8x1xf32>
    %118 = arith.divf %116, %117 : vector<8x1xf32>
    %cst_32 = arith.constant 1.1920929E-7 : f32
    %119 = vector.broadcast %cst_32 : f32 to vector<8x1xf32>
    %120 = arith.addf %118, %119 : vector<8x1xf32>
    %121 = math.rsqrt %120 : vector<8x1xf32>
    %122 = vector.broadcast %121 : vector<8x1xf32> to vector<8x48xf32>
    %123 = arith.mulf %111, %122 : vector<8x48xf32>
    %124 = vector.broadcast %113 : vector<1x48xf32> to vector<8x48xf32>
    %125 = arith.mulf %123, %124 : vector<8x48xf32>
    %126 = arith.truncf %125 : vector<8x48xf32> to vector<8x48xbf16>
    %c0_33 = arith.constant 0 : index
    %c0_34 = arith.constant 0 : index
    %c0_35 = arith.constant 0 : index
    %127 = vector.load %arg10[%c0_33, %c0_34, %c0_35] : memref<1x48x128xbf16, #tpu.memory_space<vmem>>, vector<1x48x128xbf16>
    %128 = vector.shape_cast %127 : vector<1x48x128xbf16> to vector<48x128xbf16>
    %cst_36 = arith.constant dense<0.000000e+00> : vector<8x128xf32>
    %129 = tpu.matmul %126, %128, %cst_36 {dimension_numbers = #tpu.dot_dimension_numbers<[1], [0], [0], [1], [0, 0, 1, 1], [], []>} : vector<8x48xbf16>, vector<48x128xbf16>, vector<8x128xf32> -> vector<8x128xf32>
    %c0_37 = arith.constant 0 : index
    %c0_38 = arith.constant 0 : index
    %c0_39 = arith.constant 0 : index
    %130 = vector.load %arg11[%c0_37, %c0_38, %c0_39] : memref<1x1x128xf32, #tpu.memory_space<vmem>>, vector<1x1x128xf32>
    %131 = vector.shape_cast %130 : vector<1x1x128xf32> to vector<1x128xf32>
    %132 = vector.broadcast %131 : vector<1x128xf32> to vector<8x128xf32>
    %133 = arith.addf %129, %132 : vector<8x128xf32>
    %c0_40 = arith.constant 0 : index
    %c0_41 = arith.constant 0 : index
    %c0_42 = arith.constant 0 : index
    %134 = vector.load %arg12[%c0_40, %c0_41, %c0_42] : memref<1x48x128xbf16, #tpu.memory_space<vmem>>, vector<1x48x128xbf16>
    %135 = vector.shape_cast %134 : vector<1x48x128xbf16> to vector<48x128xbf16>
    %cst_43 = arith.constant dense<0.000000e+00> : vector<8x128xf32>
    %136 = tpu.matmul %126, %135, %cst_43 {dimension_numbers = #tpu.dot_dimension_numbers<[1], [0], [0], [1], [0, 0, 1, 1], [], []>} : vector<8x48xbf16>, vector<48x128xbf16>, vector<8x128xf32> -> vector<8x128xf32>
    %c0_44 = arith.constant 0 : index
    %c0_45 = arith.constant 0 : index
    %c0_46 = arith.constant 0 : index
    %137 = vector.load %arg13[%c0_44, %c0_45, %c0_46] : memref<1x1x128xf32, #tpu.memory_space<vmem>>, vector<1x1x128xf32>
    %138 = vector.shape_cast %137 : vector<1x1x128xf32> to vector<1x128xf32>
    %139 = vector.broadcast %138 : vector<1x128xf32> to vector<8x128xf32>
    %140 = arith.addf %136, %139 : vector<8x128xf32>
    %141 = arith.mulf %140, %140 : vector<8x128xf32>
    %142 = arith.mulf %140, %141 : vector<8x128xf32>
    %cst_47 = arith.constant 4.471500e-02 : f32
    %143 = vector.broadcast %cst_47 : f32 to vector<8x128xf32>
    %144 = arith.mulf %143, %142 : vector<8x128xf32>
    %145 = arith.addf %140, %144 : vector<8x128xf32>
    %cst_48 = arith.constant 0.797884583 : f32
    %146 = vector.broadcast %cst_48 : f32 to vector<8x128xf32>
    %147 = arith.mulf %146, %145 : vector<8x128xf32>
    %148 = math.tanh %147 : vector<8x128xf32>
    %cst_49 = arith.constant 1.000000e+00 : f32
    %149 = vector.broadcast %cst_49 : f32 to vector<8x128xf32>
    %150 = arith.addf %149, %148 : vector<8x128xf32>
    %cst_50 = arith.constant 5.000000e-01 : f32
    %151 = vector.broadcast %cst_50 : f32 to vector<8x128xf32>
    %152 = arith.mulf %151, %150 : vector<8x128xf32>
    %153 = arith.mulf %140, %152 : vector<8x128xf32>
    %154 = arith.mulf %153, %133 : vector<8x128xf32>
    %155 = arith.truncf %154 : vector<8x128xf32> to vector<8x128xbf16>
    %c0_51 = arith.constant 0 : index
    %c0_52 = arith.constant 0 : index
    %c0_53 = arith.constant 0 : index
    %156 = vector.load %arg14[%c0_51, %c0_52, %c0_53] : memref<1x128x48xbf16, #tpu.memory_space<vmem>>, vector<1x128x48xbf16>
    %157 = vector.shape_cast %156 : vector<1x128x48xbf16> to vector<128x48xbf16>
    %cst_54 = arith.constant dense<0.000000e+00> : vector<8x48xf32>
    %158 = tpu.matmul %155, %157, %cst_54 {dimension_numbers = #tpu.dot_dimension_numbers<[1], [0], [0], [1], [0, 0, 1, 1], [], []>} : vector<8x128xbf16>, vector<128x48xbf16>, vector<8x48xf32> -> vector<8x48xf32>
    %c0_55 = arith.constant 0 : index
    %c0_56 = arith.constant 0 : index
    %c0_57 = arith.constant 0 : index
    %159 = vector.load %arg15[%c0_55, %c0_56, %c0_57] : memref<1x1x48xf32, #tpu.memory_space<vmem>>, vector<1x1x48xf32>
    %160 = vector.shape_cast %159 : vector<1x1x48xf32> to vector<1x48xf32>
    %161 = vector.broadcast %160 : vector<1x48xf32> to vector<8x48xf32>
    %162 = arith.addf %158, %161 : vector<8x48xf32>
    %163 = arith.addf %162, %111 : vector<8x48xf32>
    %c0_58 = arith.constant 0 : index
    %c0_59 = arith.constant 0 : index
    %c0_60 = arith.constant 0 : index
    %164 = vector.load %arg16[%c0_58, %c0_59, %c0_60] : memref<1x8x48xf32, #tpu.memory_space<vmem>>, vector<1x8x48xf32>
    %165 = vector.shape_cast %164 : vector<1x8x48xf32> to vector<8x48xf32>
    %166 = vector.shape_cast %163 : vector<8x48xf32> to vector<1x8x48xf32>
    tpu.vector_store %arg16[%c0_58, %c0_59, %c0_60], %166 {strides = array<i32>} : memref<1x8x48xf32, #tpu.memory_space<vmem>>, vector<1x8x48xf32>,
    %c1_i32 = arith.constant 1 : i32
    %167 = arith.cmpi eq, %arg1, %c1_i32 : i32
    %168 = arith.extui %167 : i1 to i32
    %c0_i32_61 = arith.constant 0 : i32
    %169 = arith.cmpi ne, %168, %c0_i32_61 : i32
    scf.if %169 {
      %c0_62 = arith.constant 0 : index
      %c0_63 = arith.constant 0 : index
      %170 = vector.load %arg5[%c0_62, %c0_63] : memref<1x48xf32, #tpu.memory_space<vmem>>, vector<1x48xf32>
      %171 = arith.mulf %163, %163 : vector<8x48xf32>
      %cst_64 = arith.constant dense<0.000000e+00> : vector<8xf32>
      %172 = vector.multi_reduction <add>, %171, %cst_64 [1] : vector<8x48xf32> to vector<8xf32>
      %173 = vector.shape_cast %172 : vector<8xf32> to vector<8x1xf32>
      %cst_65 = arith.constant 4.800000e+01 : f32
      %174 = vector.broadcast %cst_65 : f32 to vector<8x1xf32>
      %175 = arith.divf %173, %174 : vector<8x1xf32>
      %cst_66 = arith.constant 1.1920929E-7 : f32
      %176 = vector.broadcast %cst_66 : f32 to vector<8x1xf32>
      %177 = arith.addf %175, %176 : vector<8x1xf32>
      %178 = math.rsqrt %177 : vector<8x1xf32>
      %179 = vector.broadcast %178 : vector<8x1xf32> to vector<8x48xf32>
      %180 = arith.mulf %163, %179 : vector<8x48xf32>
      %181 = vector.broadcast %170 : vector<1x48xf32> to vector<8x48xf32>
      %182 = arith.mulf %180, %181 : vector<8x48xf32>
      %c0_67 = arith.constant 0 : index
      %c0_68 = arith.constant 0 : index
      %c0_69 = arith.constant 0 : index
      %183 = vector.load %arg16[%c0_67, %c0_68, %c0_69] : memref<1x8x48xf32, #tpu.memory_space<vmem>>, vector<1x8x48xf32>
      %184 = vector.shape_cast %183 : vector<1x8x48xf32> to vector<8x48xf32>
      %185 = vector.shape_cast %182 : vector<8x48xf32> to vector<1x8x48xf32>
      tpu.vector_store %arg16[%c0_67, %c0_68, %c0_69], %185 {strides = array<i32>} : memref<1x8x48xf32, #tpu.memory_space<vmem>>, vector<1x8x48xf32>,
    } else {
    }
    return
  }
  func.func @transform_0(%arg0: i32, %arg1: i32) -> (i32, i32, i32) {
    %c0_i32 = arith.constant 0 : i32
    %c0_i32_0 = arith.constant 0 : i32
    %c0_i32_1 = arith.constant 0 : i32
    return %arg0, %c0_i32, %c0_i32_0 : i32, i32, i32
  }
  func.func @transform_1(%arg0: i32, %arg1: i32) -> (i32, i32) {
    %c0_i32 = arith.constant 0 : i32
    %c0_i32_0 = arith.constant 0 : i32
    %c0_i32_1 = arith.constant 0 : i32
    return %c0_i32, %c0_i32_0 : i32, i32
  }
  func.func @transform_2(%arg0: i32, %arg1: i32) -> (i32, i32) {
    %c0_i32 = arith.constant 0 : i32
    %c0_i32_0 = arith.constant 0 : i32
    %c0_i32_1 = arith.constant 0 : i32
    return %c0_i32, %c0_i32_0 : i32, i32
  }
  func.func @transform_3(%arg0: i32, %arg1: i32) -> (i32, i32) {
    %c0_i32 = arith.constant 0 : i32
    %c0_i32_0 = arith.constant 0 : i32
    %c0_i32_1 = arith.constant 0 : i32
    return %c0_i32, %c0_i32_0 : i32, i32
  }
  func.func @transform_4(%arg0: i32, %arg1: i32) -> (i32, i32, i32) {
    %c0_i32 = arith.constant 0 : i32
    %c0_i32_0 = arith.constant 0 : i32
    %c0_i32_1 = arith.constant 0 : i32
    return %arg1, %c0_i32, %c0_i32_0 : i32, i32, i32
  }
  func.func @transform_5(%arg0: i32, %arg1: i32) -> (i32, i32, i32) {
    %c0_i32 = arith.constant 0 : i32
    %c0_i32_0 = arith.constant 0 : i32
    %c0_i32_1 = arith.constant 0 : i32
    return %arg1, %c0_i32, %c0_i32_0 : i32, i32, i32
  }
  func.func @transform_6(%arg0: i32, %arg1: i32) -> (i32, i32, i32) {
    %c0_i32 = arith.constant 0 : i32
    %c0_i32_0 = arith.constant 0 : i32
    %c0_i32_1 = arith.constant 0 : i32
    return %arg1, %c0_i32, %c0_i32_0 : i32, i32, i32
  }
  func.func @transform_7(%arg0: i32, %arg1: i32) -> (i32, i32, i32) {
    %c0_i32 = arith.constant 0 : i32
    %c0_i32_0 = arith.constant 0 : i32
    %c0_i32_1 = arith.constant 0 : i32
    return %arg1, %c0_i32, %c0_i32_0 : i32, i32, i32
  }
  func.func @transform_8(%arg0: i32, %arg1: i32) -> (i32, i32, i32) {
    %c0_i32 = arith.constant 0 : i32
    %c0_i32_0 = arith.constant 0 : i32
    %c0_i32_1 = arith.constant 0 : i32
    return %arg1, %c0_i32, %c0_i32_0 : i32, i32, i32
  }
  func.func @transform_9(%arg0: i32, %arg1: i32) -> (i32, i32, i32) {
    %c0_i32 = arith.constant 0 : i32
    %c0_i32_0 = arith.constant 0 : i32
    %c0_i32_1 = arith.constant 0 : i32
    return %arg1, %c0_i32, %c0_i32_0 : i32, i32, i32
  }
  func.func @transform_10(%arg0: i32, %arg1: i32) -> (i32, i32, i32) {
    %c0_i32 = arith.constant 0 : i32
    %c0_i32_0 = arith.constant 0 : i32
    %c0_i32_1 = arith.constant 0 : i32
    return %arg1, %c0_i32, %c0_i32_0 : i32, i32, i32
  }
  func.func @transform_11(%arg0: i32, %arg1: i32) -> (i32, i32, i32) {
    %c0_i32 = arith.constant 0 : i32
    %c0_i32_0 = arith.constant 0 : i32
    %c0_i32_1 = arith.constant 0 : i32
    return %arg1, %c0_i32, %c0_i32_0 : i32, i32, i32
  }
  func.func @transform_12(%arg0: i32, %arg1: i32) -> (i32, i32, i32) {
    %c0_i32 = arith.constant 0 : i32
    %c0_i32_0 = arith.constant 0 : i32
    %c0_i32_1 = arith.constant 0 : i32
    return %arg1, %c0_i32, %c0_i32_0 : i32, i32, i32
  }
  func.func @transform_13(%arg0: i32, %arg1: i32) -> (i32, i32, i32) {
    %c0_i32 = arith.constant 0 : i32
    %c0_i32_0 = arith.constant 0 : i32
    %c0_i32_1 = arith.constant 0 : i32
    return %arg1, %c0_i32, %c0_i32_0 : i32, i32, i32
  }
  func.func @transform_14(%arg0: i32, %arg1: i32) -> (i32, i32, i32) {
    %c0_i32 = arith.constant 0 : i32
    %c0_i32_0 = arith.constant 0 : i32
    %c0_i32_1 = arith.constant 0 : i32
    return %arg0, %c0_i32, %c0_i32_0 : i32, i32, i32
  }
}

</mosaic_0001>

<llo_original>
// kernel: tpu_custom_call.1
$region0: #{tpu_custom_call.1}
  #allocation0 [shape = 'u32[]', space=smem, size = 0x4, offset = 0x4, fixed_abs, tag = 'smem constant byte address 0x4 - core index']
  #allocation1 [shape = 'u32[144,128]{1,0:T(1,128)}', space=vmem, size = 0x12000, scoped, tag = 'internal scratch']
  %s0 = inlined_call_operand.hbm [shape: f32[2,8,48], index: 0, kind: input, shape index: {}]
  %s1 = inlined_call_operand.hbm [shape: f32[8,16], index: 1, kind: input, shape index: {}]
  %s2 = inlined_call_operand.hbm [shape: f32[8,16], index: 2, kind: input, shape index: {}]
  %s3 = inlined_call_operand.hbm [shape: f32[1,48], index: 3, kind: input, shape index: {}]
  %s4 = inlined_call_operand.hbm [shape: f32[2,1,48], index: 4, kind: input, shape index: {}]
  %s5 = inlined_call_operand.hbm [shape: bf16[2,48,192], index: 5, kind: input, shape index: {}]
  %s6 = inlined_call_operand.hbm [shape: bf16[2,64,48], index: 6, kind: input, shape index: {}]
  %s7 = inlined_call_operand.hbm [shape: f32[2,1,48], index: 7, kind: input, shape index: {}]
  %s8 = inlined_call_operand.hbm [shape: bf16[2,48,128], index: 8, kind: input, shape index: {}]
  %s9 = inlined_call_operand.hbm [shape: f32[2,1,128], index: 9, kind: input, shape index: {}]
  %s10 = inlined_call_operand.hbm [shape: bf16[2,48,128], index: 10, kind: input, shape index: {}]
  %s11 = inlined_call_operand.hbm [shape: f32[2,1,128], index: 11, kind: input, shape index: {}]
  %s12 = inlined_call_operand.hbm [shape: bf16[2,128,48], index: 12, kind: input, shape index: {}]
  %s13 = inlined_call_operand.hbm [shape: f32[2,1,48], index: 13, kind: input, shape index: {}]
  %s14 = inlined_call_operand.hbm [shape: f32[2,8,48], index: 14, kind: output, shape index: {}]
  %s15 = sld [smem:[#allocation0]]
  $region153: #{tpu_custom_call.1} parent=0
    _
  %s17 = ssub.s32 1, %s15
  %s18 = scalar_select 0, %s17, %s15
  $region1: #{tpu_custom_call.1} parent=0
    #allocation2 [shape = 'u8[8192]{0}', space=vmem, size = 0x2000, scoped, tag = 'input window, operand 0']
    #allocation3 [shape = 's32[2]{0}', space=sflag, size = 0x8, scoped, tag = 'scoped memory for tpu_custom_call.1']
    #allocation4 [shape = 's32[2]{0}', space=sflag, size = 0x8, scoped, tag = 'scoped memory for tpu_custom_call.1']
    #allocation5 [shape = 'u8[4096]{0}', space=vmem, size = 0x1000, scoped, tag = 'input window, operand 1, single buffered']
    #allocation6 [shape = 's32[1]{0}', space=sflag, size = 0x4, scoped, tag = 'scoped memory for tpu_custom_call.1']
    #allocation7 [shape = 'u8[4096]{0}', space=vmem, size = 0x1000, scoped, tag = 'input window, operand 2, single buffered']
    #allocation8 [shape = 'u8[512]{0}', space=vmem, size = 0x400, scoped, tag = 'input window, operand 3, single buffered']
    #allocation9 [shape = 's32[1]{0}', space=sflag, size = 0x4, scoped, tag = 'scoped memory for tpu_custom_call.1']
    #allocation10 [shape = 'u8[1024]{0}', space=vmem, size = 0x400, scoped, tag = 'input window, operand 4']
    #allocation11 [shape = 'u8[49152]{0}', space=vmem, size = 0xc000, scoped, tag = 'input window, operand 5']
    #allocation12 [shape = 'u8[32768]{0}', space=vmem, size = 0x8000, scoped, tag = 'input window, operand 6']
    #allocation13 [shape = 'u8[1024]{0}', space=vmem, size = 0x400, scoped, tag = 'input window, operand 7']
    #allocation14 [shape = 'u8[24576]{0}', space=vmem, size = 0x6000, scoped, tag = 'input window, operand 8']
    #allocation15 [shape = 'u8[1024]{0}', space=vmem, size = 0x400, scoped, tag = 'input window, operand 9']
    #allocation16 [shape = 'u8[24576]{0}', space=vmem, size = 0x6000, scoped, tag = 'input window, operand 10']
    #allocation17 [shape = 'u8[1024]{0}', space=vmem, size = 0x400, scoped, tag = 'input window, operand 11']
    #allocation18 [shape = 'u8[65536]{0}', space=vmem, size = 0x10000, scoped, tag = 'input window, operand 12']
    #allocation19 [shape = 'u8[1024]{0}', space=vmem, size = 0x400, scoped, tag = 'input window, operand 13']
    #allocation20 [shape = 'u8[8192]{0}', space=vmem, size = 0x2000, scoped, tag = 'output window, operand 0']
    %19 = vsyncpa [#allocation3], 0
    %s20 = scalar_lea.sflag [#allocation3], 1
    %21 = vsyncpa %s20, 0
    %22 = vsyncpa [#allocation6], 0
    %23 = vsyncpa [#allocation9], 0
    %24 = vsyncpa [#allocation4], 0
    %s25 = scalar_lea.sflag [#allocation4], 1
    %26 = vsyncpa %s25, 0
    loop: start=0, step=1, limit=6
    $region2: #{tpu_custom_call.1} parent=1 // loop_pre_header
      _
    $region3: #{tpu_custom_call.1} parent=1 // loop_header
      %s28 = sphi 0, %s32
      %p29 = scmp.ge.s32.totalorder %s28, 6
      %s35 = sphi 0, %s47
      %s36 = sphi 0, %s43
      %s37 = sphi 0, %s35
      %s38 = sphi 0, %s36
      %s39 = sphi 0, %s37
      %s40 = sphi 0, %s38
      %s50 = sphi 0, %s52
      %s53 = sphi 0, %s50
      %s54 = sphi 0, %s53
      %s70 = sphi 0, %s54
      %s74 = sphi 0, %s74
      %s76 = sphi 0, %s74
      %s77 = sphi 0, %s76
      %s91 = sphi 0, %s77
      %s95 = sphi 0, %s95
      %s97 = sphi 0, %s95
      %s98 = sphi 0, %s97
      %s112 = sphi 0, %s98
      %s116 = sphi 0, %s116
      %s118 = sphi 0, %s116
      %s119 = sphi 0, %s118
      %s133 = sphi 0, %s119
      %s139 = sphi 0, %s141
      %s142 = sphi 0, %s139
      %s143 = sphi 0, %s142
      %s159 = sphi 0, %s143
      %s165 = sphi 0, %s167
      %s168 = sphi 0, %s165
      %s169 = sphi 0, %s168
      %s185 = sphi 0, %s169
      %s191 = sphi 0, %s193
      %s194 = sphi 0, %s191
      %s195 = sphi 0, %s194
      %s211 = sphi 0, %s195
      %s217 = sphi 0, %s219
      %s220 = sphi 0, %s217
      %s221 = sphi 0, %s220
      %s237 = sphi 0, %s221
      %s243 = sphi 0, %s245
      %s246 = sphi 0, %s243
      %s247 = sphi 0, %s246
      %s263 = sphi 0, %s247
      %s269 = sphi 0, %s271
      %s272 = sphi 0, %s269
      %s273 = sphi 0, %s272
      %s289 = sphi 0, %s273
      %s295 = sphi 0, %s297
      %s298 = sphi 0, %s295
      %s299 = sphi 0, %s298
      %s315 = sphi 0, %s299
      %s321 = sphi 0, %s323
      %s324 = sphi 0, %s321
      %s325 = sphi 0, %s324
      %s341 = sphi 0, %s325
      %s347 = sphi 0, %s349
      %s350 = sphi 0, %s347
      %s351 = sphi 0, %s350
      %s367 = sphi 0, %s351
      %s373 = sphi 0, %s375
      %s376 = sphi 0, %s373
      %s377 = sphi 0, %s376
      %s393 = sphi 0, %s377
      %s399 = sphi 0, %s401
      %s402 = sphi 0, %s399
      %s403 = sphi 0, %s402
      %s419 = sphi 0, %s403
    $region4: #{tpu_custom_call.1} parent=1 // loop_header_branch
      %31 = sbr.rel (%p29) target = $region8
    $region5: #{tpu_custom_call.1} parent=1 // loop_body
      %s33 = ssub.s32 %s28, 1
      %s34 = ssub.s32 %s28, 2
      %s41 = sadd.s32 1, %s36
      %p42 = scmp.ge.s32.totalorder %s41, 2
      %s43 = scalar_select %p42, 0, %s41
      %s44 = sadd.s32 1, %s35
      %s45 = scalar_select %p42, %s44, %s35
      %p46 = scmp.ge.s32.totalorder %s45, 2
      %s47 = scalar_select %p46, 0, %s45
      %s48 = ssub.s32 %s35, %s47
      %p49 = scmp.eq.s32.totalorder %s48, 0
      %s51 = sadd.s32 %s50, 1
      %s52 = scalar_select %p49, %s50, %s51
      %p55 = pneg %p49
      %p56 = scmp.eq.s32.totalorder %s28, 3
      %p57 = por %p55, %p56
      %p58 = scmp.ne.s32.totalorder %s50, %s53
      %p59 = scmp.eq.s32.totalorder %s28, 0
      %p60 = por %p58, %p59
      %p61 = scmp.ne.s32.totalorder %s50, %s53
      %p62 = scmp.eq.s32.totalorder %s33, 3
      %p63 = por %p61, %p62
      %p64 = scmp.ne.s32.totalorder %s53, %s54
      %p65 = scmp.eq.s32.totalorder %s33, 0
      %p66 = por %p64, %p65
      %p67 = scmp.ne.s32.totalorder %s53, %s54
      %p68 = scmp.eq.s32.totalorder %s34, 3
      %p69 = por %p67, %p68
      %p71 = scmp.ne.s32.totalorder %s54, %s70
      %p72 = scmp.eq.s32.totalorder %s34, 0
      %p73 = por %p71, %p72
      %s75 = sadd.s32 %s74, 1
      %p78 = scmp.eq.s32.totalorder %s28, 3
      %p79 = scmp.ne.s32.totalorder %s74, %s76
      %p80 = scmp.eq.s32.totalorder %s28, 0
      %p81 = por %p79, %p80
      %p82 = scmp.ne.s32.totalorder %s74, %s76
      %p83 = scmp.eq.s32.totalorder %s33, 3
      %p84 = por %p82, %p83
      %p85 = scmp.ne.s32.totalorder %s76, %s77
      %p86 = scmp.eq.s32.totalorder %s33, 0
      %p87 = por %p85, %p86
      %p88 = scmp.ne.s32.totalorder %s76, %s77
      %p89 = scmp.eq.s32.totalorder %s34, 3
      %p90 = por %p88, %p89
      %p92 = scmp.ne.s32.totalorder %s77, %s91
      %p93 = scmp.eq.s32.totalorder %s34, 0
      %p94 = por %p92, %p93
      %s96 = sadd.s32 %s95, 1
      %p99 = scmp.eq.s32.totalorder %s28, 3
      %p100 = scmp.ne.s32.totalorder %s95, %s97
      %p101 = scmp.eq.s32.totalorder %s28, 0
      %p102 = por %p100, %p101
      %p103 = scmp.ne.s32.totalorder %s95, %s97
      %p104 = scmp.eq.s32.totalorder %s33, 3
      %p105 = por %p103, %p104
      %p106 = scmp.ne.s32.totalorder %s97, %s98
      %p107 = scmp.eq.s32.totalorder %s33, 0
      %p108 = por %p106, %p107
      %p109 = scmp.ne.s32.totalorder %s97, %s98
      %p110 = scmp.eq.s32.totalorder %s34, 3
      %p111 = por %p109, %p110
      %p113 = scmp.ne.s32.totalorder %s98, %s112
      %p114 = scmp.eq.s32.totalorder %s34, 0
      %p115 = por %p113, %p114
      %s117 = sadd.s32 %s116, 1
      %p120 = scmp.eq.s32.totalorder %s28, 3
      %p121 = scmp.ne.s32.totalorder %s116, %s118
      %p122 = scmp.eq.s32.totalorder %s28, 0
      %p123 = por %p121, %p122
      %p124 = scmp.ne.s32.totalorder %s116, %s118
      %p125 = scmp.eq.s32.totalorder %s33, 3
      %p126 = por %p124, %p125
      %p127 = scmp.ne.s32.totalorder %s118, %s119
      %p128 = scmp.eq.s32.totalorder %s33, 0
      %p129 = por %p127, %p128
      %p130 = scmp.ne.s32.totalorder %s118, %s119
      %p131 = scmp.eq.s32.totalorder %s34, 3
      %p132 = por %p130, %p131
      %p134 = scmp.ne.s32.totalorder %s119, %s133
      %p135 = scmp.eq.s32.totalorder %s34, 0
      %p136 = por %p134, %p135
      %s137 = ssub.s32 %s36, %s43
      %p138 = scmp.eq.s32.totalorder %s137, 0
      %s140 = sadd.s32 %s139, 1
      %s141 = scalar_select %p138, %s139, %s140
      %p144 = pneg %p138
      %p145 = scmp.eq.s32.totalorder %s28, 3
      %p146 = por %p144, %p145
      %p147 = scmp.ne.s32.totalorder %s139, %s142
      %p148 = scmp.eq.s32.totalorder %s28, 0
      %p149 = por %p147, %p148
      %p150 = scmp.ne.s32.totalorder %s139, %s142
      %p151 = scmp.eq.s32.totalorder %s33, 3
      %p152 = por %p150, %p151
      %p153 = scmp.ne.s32.totalorder %s142, %s143
      %p154 = scmp.eq.s32.totalorder %s33, 0
      %p155 = por %p153, %p154
      %p156 = scmp.ne.s32.totalorder %s142, %s143
      %p157 = scmp.eq.s32.totalorder %s34, 3
      %p158 = por %p156, %p157
      %p160 = scmp.ne.s32.totalorder %s143, %s159
      %p161 = scmp.eq.s32.totalorder %s34, 0
      %p162 = por %p160, %p161
      %s163 = ssub.s32 %s36, %s43
      %p164 = scmp.eq.s32.totalorder %s163, 0
      %s166 = sadd.s32 %s165, 1
      %s167 = scalar_select %p164, %s165, %s166
      %p170 = pneg %p164
      %p171 = scmp.eq.s32.totalorder %s28, 3
      %p172 = por %p170, %p171
      %p173 = scmp.ne.s32.totalorder %s165, %s168
      %p174 = scmp.eq.s32.totalorder %s28, 0
      %p175 = por %p173, %p174
      %p176 = scmp.ne.s32.totalorder %s165, %s168
      %p177 = scmp.eq.s32.totalorder %s33, 3
      %p178 = por %p176, %p177
      %p179 = scmp.ne.s32.totalorder %s168, %s169
      %p180 = scmp.eq.s32.totalorder %s33, 0
      %p181 = por %p179, %p180
      %p182 = scmp.ne.s32.totalorder %s168, %s169
      %p183 = scmp.eq.s32.totalorder %s34, 3
      %p184 = por %p182, %p183
      %p186 = scmp.ne.s32.totalorder %s169, %s185
      %p187 = scmp.eq.s32.totalorder %s34, 0
      %p188 = por %p186, %p187
      %s189 = ssub.s32 %s36, %s43
      %p190 = scmp.eq.s32.totalorder %s189, 0
      %s192 = sadd.s32 %s191, 1
      %s193 = scalar_select %p190, %s191, %s192
      %p196 = pneg %p190
      %p197 = scmp.eq.s32.totalorder %s28, 3
      %p198 = por %p196, %p197
      %p199 = scmp.ne.s32.totalorder %s191, %s194
      %p200 = scmp.eq.s32.totalorder %s28, 0
      %p201 = por %p199, %p200
      %p202 = scmp.ne.s32.totalorder %s191, %s194
      %p203 = scmp.eq.s32.totalorder %s33, 3
      %p204 = por %p202, %p203
      %p205 = scmp.ne.s32.totalorder %s194, %s195
      %p206 = scmp.eq.s32.totalorder %s33, 0
      %p207 = por %p205, %p206
      %p208 = scmp.ne.s32.totalorder %s194, %s195
      %p209 = scmp.eq.s32.totalorder %s34, 3
      %p210 = por %p208, %p209
      %p212 = scmp.ne.s32.totalorder %s195, %s211
      %p213 = scmp.eq.s32.totalorder %s34, 0
      %p214 = por %p212, %p213
      %s215 = ssub.s32 %s36, %s43
      %p216 = scmp.eq.s32.totalorder %s215, 0
      %s218 = sadd.s32 %s217, 1
      %s219 = scalar_select %p216, %s217, %s218
      %p222 = pneg %p216
      %p223 = scmp.eq.s32.totalorder %s28, 3
      %p224 = por %p222, %p223
      %p225 = scmp.ne.s32.totalorder %s217, %s220
      %p226 = scmp.eq.s32.totalorder %s28, 0
      %p227 = por %p225, %p226
      %p228 = scmp.ne.s32.totalorder %s217, %s220
      %p229 = scmp.eq.s32.totalorder %s33, 3
      %p230 = por %p228, %p229
      %p231 = scmp.ne.s32.totalorder %s220, %s221
      %p232 = scmp.eq.s32.totalorder %s33, 0
      %p233 = por %p231, %p232
      %p234 = scmp.ne.s32.totalorder %s220, %s221
      %p235 = scmp.eq.s32.totalorder %s34, 3
      %p236 = por %p234, %p235
      %p238 = scmp.ne.s32.totalorder %s221, %s237
      %p239 = scmp.eq.s32.totalorder %s34, 0
      %p240 = por %p238, %p239
      %s241 = ssub.s32 %s36, %s43
      %p242 = scmp.eq.s32.totalorder %s241, 0
      %s244 = sadd.s32 %s243, 1
      %s245 = scalar_select %p242, %s243, %s244
      %p248 = pneg %p242
      %p249 = scmp.eq.s32.totalorder %s28, 3
      %p250 = por %p248, %p249
      %p251 = scmp.ne.s32.totalorder %s243, %s246
      %p252 = scmp.eq.s32.totalorder %s28, 0
      %p253 = por %p251, %p252
      %p254 = scmp.ne.s32.totalorder %s243, %s246
      %p255 = scmp.eq.s32.totalorder %s33, 3
      %p256 = por %p254, %p255
      %p257 = scmp.ne.s32.totalorder %s246, %s247
      %p258 = scmp.eq.s32.totalorder %s33, 0
      %p259 = por %p257, %p258
      %p260 = scmp.ne.s32.totalorder %s246, %s247
      %p261 = scmp.eq.s32.totalorder %s34, 3
      %p262 = por %p260, %p261
      %p264 = scmp.ne.s32.totalorder %s247, %s263
      %p265 = scmp.eq.s32.totalorder %s34, 0
      %p266 = por %p264, %p265
      %s267 = ssub.s32 %s36, %s43
      %p268 = scmp.eq.s32.totalorder %s267, 0
      %s270 = sadd.s32 %s269, 1
      %s271 = scalar_select %p268, %s269, %s270
      %p274 = pneg %p268
      %p275 = scmp.eq.s32.totalorder %s28, 3
      %p276 = por %p274, %p275
      %p277 = scmp.ne.s32.totalorder %s269, %s272
      %p278 = scmp.eq.s32.totalorder %s28, 0
      %p279 = por %p277, %p278
      %p280 = scmp.ne.s32.totalorder %s269, %s272
      %p281 = scmp.eq.s32.totalorder %s33, 3
      %p282 = por %p280, %p281
      %p283 = scmp.ne.s32.totalorder %s272, %s273
      %p284 = scmp.eq.s32.totalorder %s33, 0
      %p285 = por %p283, %p284
      %p286 = scmp.ne.s32.totalorder %s272, %s273
      %p287 = scmp.eq.s32.totalorder %s34, 3
      %p288 = por %p286, %p287
      %p290 = scmp.ne.s32.totalorder %s273, %s289
      %p291 = scmp.eq.s32.totalorder %s34, 0
      %p292 = por %p290, %p291
      %s293 = ssub.s32 %s36, %s43
      %p294 = scmp.eq.s32.totalorder %s293, 0
      %s296 = sadd.s32 %s295, 1
      %s297 = scalar_select %p294, %s295, %s296
      %p300 = pneg %p294
      %p301 = scmp.eq.s32.totalorder %s28, 3
      %p302 = por %p300, %p301
      %p303 = scmp.ne.s32.totalorder %s295, %s298
      %p304 = scmp.eq.s32.totalorder %s28, 0
      %p305 = por %p303, %p304
      %p306 = scmp.ne.s32.totalorder %s295, %s298
      %p307 = scmp.eq.s32.totalorder %s33, 3
      %p308 = por %p306, %p307
      %p309 = scmp.ne.s32.totalorder %s298, %s299
      %p310 = scmp.eq.s32.totalorder %s33, 0
      %p311 = por %p309, %p310
      %p312 = scmp.ne.s32.totalorder %s298, %s299
      %p313 = scmp.eq.s32.totalorder %s34, 3
      %p314 = por %p312, %p313
      %p316 = scmp.ne.s32.totalorder %s299, %s315
      %p317 = scmp.eq.s32.totalorder %s34, 0
      %p318 = por %p316, %p317
      %s319 = ssub.s32 %s36, %s43
      %p320 = scmp.eq.s32.totalorder %s319, 0
      %s322 = sadd.s32 %s321, 1
      %s323 = scalar_select %p320, %s321, %s322
      %p326 = pneg %p320
      %p327 = scmp.eq.s32.totalorder %s28, 3
      %p328 = por %p326, %p327
      %p329 = scmp.ne.s32.totalorder %s321, %s324
      %p330 = scmp.eq.s32.totalorder %s28, 0
      %p331 = por %p329, %p330
      %p332 = scmp.ne.s32.totalorder %s321, %s324
      %p333 = scmp.eq.s32.totalorder %s33, 3
      %p334 = por %p332, %p333
      %p335 = scmp.ne.s32.totalorder %s324, %s325
      %p336 = scmp.eq.s32.totalorder %s33, 0
      %p337 = por %p335, %p336
      %p338 = scmp.ne.s32.totalorder %s324, %s325
      %p339 = scmp.eq.s32.totalorder %s34, 3
      %p340 = por %p338, %p339
      %p342 = scmp.ne.s32.totalorder %s325, %s341
      %p343 = scmp.eq.s32.totalorder %s34, 0
      %p344 = por %p342, %p343
      %s345 = ssub.s32 %s36, %s43
      %p346 = scmp.eq.s32.totalorder %s345, 0
      %s348 = sadd.s32 %s347, 1
      %s349 = scalar_select %p346, %s347, %s348
      %p352 = pneg %p346
      %p353 = scmp.eq.s32.totalorder %s28, 3
      %p354 = por %p352, %p353
      %p355 = scmp.ne.s32.totalorder %s347, %s350
      %p356 = scmp.eq.s32.totalorder %s28, 0
      %p357 = por %p355, %p356
      %p358 = scmp.ne.s32.totalorder %s347, %s350
      %p359 = scmp.eq.s32.totalorder %s33, 3
      %p360 = por %p358, %p359
      %p361 = scmp.ne.s32.totalorder %s350, %s351
      %p362 = scmp.eq.s32.totalorder %s33, 0
      %p363 = por %p361, %p362
      %p364 = scmp.ne.s32.totalorder %s350, %s351
      %p365 = scmp.eq.s32.totalorder %s34, 3
      %p366 = por %p364, %p365
      %p368 = scmp.ne.s32.totalorder %s351, %s367
      %p369 = scmp.eq.s32.totalorder %s34, 0
      %p370 = por %p368, %p369
      %s371 = ssub.s32 %s36, %s43
      %p372 = scmp.eq.s32.totalorder %s371, 0
      %s374 = sadd.s32 %s373, 1
      %s375 = scalar_select %p372, %s373, %s374
      %p378 = pneg %p372
      %p379 = scmp.eq.s32.totalorder %s28, 3
      %p380 = por %p378, %p379
      %p381 = scmp.ne.s32.totalorder %s373, %s376
      %p382 = scmp.eq.s32.totalorder %s28, 0
      %p383 = por %p381, %p382
      %p384 = scmp.ne.s32.totalorder %s373, %s376
      %p385 = scmp.eq.s32.totalorder %s33, 3
      %p386 = por %p384, %p385
      %p387 = scmp.ne.s32.totalorder %s376, %s377
      %p388 = scmp.eq.s32.totalorder %s33, 0
      %p389 = por %p387, %p388
      %p390 = scmp.ne.s32.totalorder %s376, %s377
      %p391 = scmp.eq.s32.totalorder %s34, 3
      %p392 = por %p390, %p391
      %p394 = scmp.ne.s32.totalorder %s377, %s393
      %p395 = scmp.eq.s32.totalorder %s34, 0
      %p396 = por %p394, %p395
      %s397 = ssub.s32 %s35, %s47
      %p398 = scmp.eq.s32.totalorder %s397, 0
      %s400 = sadd.s32 %s399, 1
      %s401 = scalar_select %p398, %s399, %s400
      %p404 = pneg %p398
      %p405 = scmp.eq.s32.totalorder %s28, 3
      %p406 = por %p404, %p405
      %p407 = scmp.ne.s32.totalorder %s399, %s402
      %p408 = scmp.eq.s32.totalorder %s28, 0
      %p409 = por %p407, %p408
      %p410 = scmp.ne.s32.totalorder %s399, %s402
      %p411 = scmp.eq.s32.totalorder %s33, 3
      %p412 = por %p410, %p411
      %p413 = scmp.ne.s32.totalorder %s402, %s403
      %p414 = scmp.eq.s32.totalorder %s33, 0
      %p415 = por %p413, %p414
      %p416 = scmp.ne.s32.totalorder %s402, %s403
      %p417 = scmp.eq.s32.totalorder %s34, 3
      %p418 = por %p416, %p417
      %p420 = scmp.ne.s32.totalorder %s403, %s419
      %p421 = scmp.eq.s32.totalorder %s34, 0
      %p422 = por %p420, %p421
      %p423 = scmp.le.s32.totalorder 1, %s28
      %p424 = scmp.lt.s32.totalorder %s28, 5
      %p425 = pnand %p423, %p424
      %p426 = pneg %p425
      // Predicated region
      $region9: #{tpu_custom_call.1} parent=5 // pred_check
        _
      $region10: #{tpu_custom_call.1} parent=5 // pred_check_branch
        %428 = sbr.rel (%p425) target = $region12
      $region11: #{tpu_custom_call.1} parent=5 // pred_region
        %s429 = ssub.s32 %s28, 1
        // Predicated region
        $region13: #{tpu_custom_call.1} parent=11 // pred_check
          %p430 = pneg %p87
        $region14: #{tpu_custom_call.1} parent=11 // pred_check_branch
          %432 = sbr.rel (%p430) target = $region16
        $region15: #{tpu_custom_call.1} parent=11 // pred_region
          %s434 = ssub.s32 128, 128
          %435 = vsyncadd [#allocation6], %s434
          %s437 = sshll.u32 [#allocation5], 4
          %s438 = int_to_ptr.vmem [resolvable:$true] %s437
          %440 = dma.hbm_to_vmem [thread:$0]  %s1, 128, %s438, [#allocation6]
        $region16: #{tpu_custom_call.1} parent=11 // pred_fallthru
          _
        // Predicated region
        $region17: #{tpu_custom_call.1} parent=11 // pred_check
          %p441 = pneg %p108
        $region18: #{tpu_custom_call.1} parent=11 // pred_check_branch
          %443 = sbr.rel (%p441) target = $region20
        $region19: #{tpu_custom_call.1} parent=11 // pred_region
          %s445 = ssub.s32 128, 128
          %446 = vsyncadd [#allocation6], %s445
          %s448 = sshll.u32 [#allocation7], 4
          %s449 = int_to_ptr.vmem [resolvable:$true] %s448
          %451 = dma.hbm_to_vmem [thread:$0]  %s2, 128, %s449, [#allocation6]
        $region20: #{tpu_custom_call.1} parent=11 // pred_fallthru
          _
        // Predicated region
        $region21: #{tpu_custom_call.1} parent=11 // pred_check
          %p452 = pneg %p129
        $region22: #{tpu_custom_call.1} parent=11 // pred_check_branch
          %454 = sbr.rel (%p452) target = $region24
        $region23: #{tpu_custom_call.1} parent=11 // pred_region
          %s456 = ssub.s32 16, 16
          %457 = vsyncadd [#allocation9], %s456
          %s459 = sshll.u32 [#allocation8], 4
          %s460 = int_to_ptr.vmem [resolvable:$true] %s459
          %462 = dma.hbm_to_vmem [thread:$0]  %s3, 16, %s460, [#allocation9]
        $region24: #{tpu_custom_call.1} parent=11 // pred_fallthru
          _
      $region12: #{tpu_custom_call.1} parent=5 // pred_fallthru
        _
      %p463 = scmp.lt.s32.totalorder %s28, 4
      // Predicated region
      $region25: #{tpu_custom_call.1} parent=5 // pred_check
        %p464 = pneg %p463
      $region26: #{tpu_custom_call.1} parent=5 // pred_check_branch
        %466 = sbr.rel (%p464) target = $region28
      $region27: #{tpu_custom_call.1} parent=5 // pred_region
        // Predicated region
        $region29: #{tpu_custom_call.1} parent=27 // pred_check
          %p467 = pneg %p60
        $region30: #{tpu_custom_call.1} parent=27 // pred_check_branch
          %469 = sbr.rel (%p467) target = $region32
        $region31: #{tpu_custom_call.1} parent=27 // pred_region
          %s470 = sand.u32 %s28, 1
          %s471 = scalar_lea.sflag [#allocation3], %s470
          %s472 = sand.u32 %s50, 1
          %s473 = smul.addr %s472, 8
          %s474 = scalar_lea.vmem [#allocation2], %s473
          %s476 = ssub.s32 128, 128
          %477 = vsyncadd %s471, %s476
          %s478 = smul.addr %s35, 128
          %s479 = scalar_lea.hbm %s0, %s478
          %s481 = sshll.u32 %s474, 4
          %s482 = int_to_ptr.vmem [resolvable:$true] %s481
          %484 = dma.hbm_to_vmem [thread:$0]  %s479, 128, %s482, %s471
        $region32: #{tpu_custom_call.1} parent=27 // pred_fallthru
          _
        // Predicated region
        $region33: #{tpu_custom_call.1} parent=27 // pred_check
          %p485 = pneg %p149
        $region34: #{tpu_custom_call.1} parent=27 // pred_check_branch
          %487 = sbr.rel (%p485) target = $region36
        $region35: #{tpu_custom_call.1} parent=27 // pred_region
          %s488 = sand.u32 %s28, 1
          %s489 = scalar_lea.sflag [#allocation3], %s488
          %s490 = sand.u32 %s139, 1
          %s491 = scalar_lea.vmem [#allocation10], %s490
          %s493 = ssub.s32 16, 16
          %494 = vsyncadd %s489, %s493
          %s495 = smul.addr %s36, 16
          %s496 = scalar_lea.hbm %s4, %s495
          %s498 = sshll.u32 %s491, 4
          %s499 = int_to_ptr.vmem [resolvable:$true] %s498
          %501 = dma.hbm_to_vmem [thread:$0]  %s496, 16, %s499, %s489
        $region36: #{tpu_custom_call.1} parent=27 // pred_fallthru
          _
        // Predicated region
        $region37: #{tpu_custom_call.1} parent=27 // pred_check
          %p502 = pneg %p175
        $region38: #{tpu_custom_call.1} parent=27 // pred_check_branch
          %504 = sbr.rel (%p502) target = $region40
        $region39: #{tpu_custom_call.1} parent=27 // pred_region
          %s505 = sand.u32 %s28, 1
          %s506 = scalar_lea.sflag [#allocation3], %s505
          %s507 = sand.u32 %s165, 1
          %s508 = smul.addr %s507, 48
          %s509 = scalar_lea.vmem [#allocation11], %s508
          %s511 = ssub.s32 768, 768
          %512 = vsyncadd %s506, %s511
          %s513 = smul.addr %s36, 12
          %s514 = smul.addr %s513, 64
          %s515 = scalar_lea.hbm %s5, %s514
          %s516 = sshll.u32 %s509, 4
          %s517 = int_to_ptr.vmem [resolvable:$true] %s516
          %522 = dma.hbm_to_vmem [thread:$0]  %s515, 768, %s517, %s506, 128, 128, 8
        $region40: #{tpu_custom_call.1} parent=27 // pred_fallthru
          _
        // Predicated region
        $region41: #{tpu_custom_call.1} parent=27 // pred_check
          %p523 = pneg %p201
        $region42: #{tpu_custom_call.1} parent=27 // pred_check_branch
          %525 = sbr.rel (%p523) target = $region44
        $region43: #{tpu_custom_call.1} parent=27 // pred_region
          %s526 = sand.u32 %s28, 1
          %s527 = scalar_lea.sflag [#allocation3], %s526
          %s528 = sand.u32 %s191, 1
          %s529 = smul.addr %s528, 32
          %s530 = scalar_lea.vmem [#allocation12], %s529
          %s532 = ssub.s32 512, 512
          %533 = vsyncadd %s527, %s532
          %s534 = smul.addr %s36, 8
          %s535 = smul.addr %s534, 64
          %s536 = scalar_lea.hbm %s6, %s535
          %s537 = sshll.u32 %s530, 4
          %s538 = int_to_ptr.vmem [resolvable:$true] %s537
          %543 = dma.hbm_to_vmem [thread:$0]  %s536, 512, %s538, %s527, 64, 64, 4
        $region44: #{tpu_custom_call.1} parent=27 // pred_fallthru
          _
        // Predicated region
        $region45: #{tpu_custom_call.1} parent=27 // pred_check
          %p544 = pneg %p227
        $region46: #{tpu_custom_call.1} parent=27 // pred_check_branch
          %546 = sbr.rel (%p544) target = $region48
        $region47: #{tpu_custom_call.1} parent=27 // pred_region
          %s547 = sand.u32 %s28, 1
          %s548 = scalar_lea.sflag [#allocation3], %s547
          %s549 = sand.u32 %s217, 1
          %s550 = scalar_lea.vmem [#allocation13], %s549
          %s552 = ssub.s32 16, 16
          %553 = vsyncadd %s548, %s552
          %s554 = smul.addr %s36, 16
          %s555 = scalar_lea.hbm %s7, %s554
          %s557 = sshll.u32 %s550, 4
          %s558 = int_to_ptr.vmem [resolvable:$true] %s557
          %560 = dma.hbm_to_vmem [thread:$0]  %s555, 16, %s558, %s548
        $region48: #{tpu_custom_call.1} parent=27 // pred_fallthru
          _
        // Predicated region
        $region49: #{tpu_custom_call.1} parent=27 // pred_check
          %p561 = pneg %p253
        $region50: #{tpu_custom_call.1} parent=27 // pred_check_branch
          %563 = sbr.rel (%p561) target = $region52
        $region51: #{tpu_custom_call.1} parent=27 // pred_region
          %s564 = sand.u32 %s28, 1
          %s565 = scalar_lea.sflag [#allocation3], %s564
          %s566 = sand.u32 %s243, 1
          %s567 = smul.addr %s566, 24
          %s568 = scalar_lea.vmem [#allocation14], %s567
          %s570 = ssub.s32 384, 384
          %571 = vsyncadd %s565, %s570
          %s572 = smul.addr %s36, 6
          %s573 = smul.addr %s572, 64
          %s574 = scalar_lea.hbm %s8, %s573
          %s575 = sshll.u32 %s568, 4
          %s576 = int_to_ptr.vmem [resolvable:$true] %s575
          %581 = dma.hbm_to_vmem [thread:$0]  %s574, 384, %s576, %s565, 64, 64, 4
        $region52: #{tpu_custom_call.1} parent=27 // pred_fallthru
          _
        // Predicated region
        $region53: #{tpu_custom_call.1} parent=27 // pred_check
          %p582 = pneg %p279
        $region54: #{tpu_custom_call.1} parent=27 // pred_check_branch
          %584 = sbr.rel (%p582) target = $region56
        $region55: #{tpu_custom_call.1} parent=27 // pred_region
          %s585 = sand.u32 %s28, 1
          %s586 = scalar_lea.sflag [#allocation3], %s585
          %s587 = sand.u32 %s269, 1
          %s588 = scalar_lea.vmem [#allocation15], %s587
          %s590 = ssub.s32 16, 16
          %591 = vsyncadd %s586, %s590
          %s592 = smul.addr %s36, 16
          %s593 = scalar_lea.hbm %s9, %s592
          %s595 = sshll.u32 %s588, 4
          %s596 = int_to_ptr.vmem [resolvable:$true] %s595
          %598 = dma.hbm_to_vmem [thread:$0]  %s593, 16, %s596, %s586
        $region56: #{tpu_custom_call.1} parent=27 // pred_fallthru
          _
        // Predicated region
        $region57: #{tpu_custom_call.1} parent=27 // pred_check
          %p599 = pneg %p305
        $region58: #{tpu_custom_call.1} parent=27 // pred_check_branch
          %601 = sbr.rel (%p599) target = $region60
        $region59: #{tpu_custom_call.1} parent=27 // pred_region
          %s602 = sand.u32 %s28, 1
          %s603 = scalar_lea.sflag [#allocation3], %s602
          %s604 = sand.u32 %s295, 1
          %s605 = smul.addr %s604, 24
          %s606 = scalar_lea.vmem [#allocation16], %s605
          %s608 = ssub.s32 384, 384
          %609 = vsyncadd %s603, %s608
          %s610 = smul.addr %s36, 6
          %s611 = smul.addr %s610, 64
          %s612 = scalar_lea.hbm %s10, %s611
          %s613 = sshll.u32 %s606, 4
          %s614 = int_to_ptr.vmem [resolvable:$true] %s613
          %619 = dma.hbm_to_vmem [thread:$0]  %s612, 384, %s614, %s603, 64, 64, 4
        $region60: #{tpu_custom_call.1} parent=27 // pred_fallthru
          _
        // Predicated region
        $region61: #{tpu_custom_call.1} parent=27 // pred_check
          %p620 = pneg %p331
        $region62: #{tpu_custom_call.1} parent=27 // pred_check_branch
          %622 = sbr.rel (%p620) target = $region64
        $region63: #{tpu_custom_call.1} parent=27 // pred_region
          %s623 = sand.u32 %s28, 1
          %s624 = scalar_lea.sflag [#allocation3], %s623
          %s625 = sand.u32 %s321, 1
          %s626 = scalar_lea.vmem [#allocation17], %s625
          %s628 = ssub.s32 16, 16
          %629 = vsyncadd %s624, %s628
          %s630 = smul.addr %s36, 16
          %s631 = scalar_lea.hbm %s11, %s630
          %s633 = sshll.u32 %s626, 4
          %s634 = int_to_ptr.vmem [resolvable:$true] %s633
          %636 = dma.hbm_to_vmem [thread:$0]  %s631, 16, %s634, %s624
        $region64: #{tpu_custom_call.1} parent=27 // pred_fallthru
          _
        // Predicated region
        $region65: #{tpu_custom_call.1} parent=27 // pred_check
          %p637 = pneg %p357
        $region66: #{tpu_custom_call.1} parent=27 // pred_check_branch
          %639 = sbr.rel (%p637) target = $region68
        $region67: #{tpu_custom_call.1} parent=27 // pred_region
          %s640 = sand.u32 %s28, 1
          %s641 = scalar_lea.sflag [#allocation3], %s640
          %s642 = sand.u32 %s347, 1
          %s643 = smul.addr %s642, 64
          %s644 = scalar_lea.vmem [#allocation18], %s643
          %s646 = ssub.s32 1024, 1024
          %647 = vsyncadd %s641, %s646
          %s648 = smul.addr %s36, 16
          %s649 = smul.addr %s648, 64
          %s650 = scalar_lea.hbm %s12, %s649
          %s651 = sshll.u32 %s644, 4
          %s652 = int_to_ptr.vmem [resolvable:$true] %s651
          %657 = dma.hbm_to_vmem [thread:$0]  %s650, 1024, %s652, %s641, 64, 64, 4
        $region68: #{tpu_custom_call.1} parent=27 // pred_fallthru
          _
        // Predicated region
        $region69: #{tpu_custom_call.1} parent=27 // pred_check
          %p658 = pneg %p383
        $region70: #{tpu_custom_call.1} parent=27 // pred_check_branch
          %660 = sbr.rel (%p658) target = $region72
        $region71: #{tpu_custom_call.1} parent=27 // pred_region
          %s661 = sand.u32 %s28, 1
          %s662 = scalar_lea.sflag [#allocation3], %s661
          %s663 = sand.u32 %s373, 1
          %s664 = scalar_lea.vmem [#allocation19], %s663
          %s666 = ssub.s32 16, 16
          %667 = vsyncadd %s662, %s666
          %s668 = smul.addr %s36, 16
          %s669 = scalar_lea.hbm %s13, %s668
          %s671 = sshll.u32 %s664, 4
          %s672 = int_to_ptr.vmem [resolvable:$true] %s671
          %674 = dma.hbm_to_vmem [thread:$0]  %s669, 16, %s672, %s662
        $region72: #{tpu_custom_call.1} parent=27 // pred_fallthru
          _
      $region28: #{tpu_custom_call.1} parent=5 // pred_fallthru
        _
      %p675 = scmp.le.s32.totalorder 1, %s28
      %p676 = scmp.lt.s32.totalorder %s28, 5
      %p677 = pnand %p675, %p676
      %p678 = pneg %p677
      // Predicated region
      $region73: #{tpu_custom_call.1} parent=5 // pred_check
        _
      $region74: #{tpu_custom_call.1} parent=5 // pred_check_branch
        %680 = sbr.rel (%p677) target = $region76
      $region75: #{tpu_custom_call.1} parent=5 // pred_region
        %s681 = ssub.s32 %s28, 1
        %s682 = sand.u32 %s33, 1
        %s683 = scalar_lea.sflag [#allocation3], %s682
        %s684 = sand.u32 %s53, 1
        %s685 = smul.addr %s684, 8
        %s686 = scalar_lea.vmem [#allocation2], %s685
        // Predicated region
        $region77: #{tpu_custom_call.1} parent=75 // pred_check
          %p687 = pneg %p66
        $region78: #{tpu_custom_call.1} parent=75 // pred_check_branch
          %689 = sbr.rel (%p687) target = $region80
        $region79: #{tpu_custom_call.1} parent=75 // pred_region
          %690 = dma.done %s683, 128
        $region80: #{tpu_custom_call.1} parent=75 // pred_fallthru
          _
        // Predicated region
        $region81: #{tpu_custom_call.1} parent=75 // pred_check
          %p691 = pneg %p87
        $region82: #{tpu_custom_call.1} parent=75 // pred_check_branch
          %693 = sbr.rel (%p691) target = $region84
        $region83: #{tpu_custom_call.1} parent=75 // pred_region
          %694 = dma.done [#allocation6], 128
        $region84: #{tpu_custom_call.1} parent=75 // pred_fallthru
          _
        // Predicated region
        $region85: #{tpu_custom_call.1} parent=75 // pred_check
          %p695 = pneg %p108
        $region86: #{tpu_custom_call.1} parent=75 // pred_check_branch
          %697 = sbr.rel (%p695) target = $region88
        $region87: #{tpu_custom_call.1} parent=75 // pred_region
          %698 = dma.done [#allocation6], 128
        $region88: #{tpu_custom_call.1} parent=75 // pred_fallthru
          _
        // Predicated region
        $region89: #{tpu_custom_call.1} parent=75 // pred_check
          %p699 = pneg %p129
        $region90: #{tpu_custom_call.1} parent=75 // pred_check_branch
          %701 = sbr.rel (%p699) target = $region92
        $region91: #{tpu_custom_call.1} parent=75 // pred_region
          %702 = dma.done [#allocation9], 16
        $region92: #{tpu_custom_call.1} parent=75 // pred_fallthru
          _
        %s703 = sand.u32 %s33, 1
        %s704 = scalar_lea.sflag [#allocation3], %s703
        %s705 = sand.u32 %s142, 1
        %s706 = scalar_lea.vmem [#allocation10], %s705
        // Predicated region
        $region93: #{tpu_custom_call.1} parent=75 // pred_check
          %p707 = pneg %p155
        $region94: #{tpu_custom_call.1} parent=75 // pred_check_branch
          %709 = sbr.rel (%p707) target = $region96
        $region95: #{tpu_custom_call.1} parent=75 // pred_region
          %710 = dma.done %s704, 16
        $region96: #{tpu_custom_call.1} parent=75 // pred_fallthru
          _
        %s711 = sand.u32 %s33, 1
        %s712 = scalar_lea.sflag [#allocation3], %s711
        %s713 = sand.u32 %s168, 1
        %s714 = smul.addr %s713, 48
        %s715 = scalar_lea.vmem [#allocation11], %s714
        // Predicated region
        $region97: #{tpu_custom_call.1} parent=75 // pred_check
          %p716 = pneg %p181
        $region98: #{tpu_custom_call.1} parent=75 // pred_check_branch
          %718 = sbr.rel (%p716) target = $region100
        $region99: #{tpu_custom_call.1} parent=75 // pred_region
          %719 = dma.done %s712, 768
        $region100: #{tpu_custom_call.1} parent=75 // pred_fallthru
          _
        %s720 = sand.u32 %s33, 1
        %s721 = scalar_lea.sflag [#allocation3], %s720
        %s722 = sand.u32 %s194, 1
        %s723 = smul.addr %s722, 32
        %s724 = scalar_lea.vmem [#allocation12], %s723
        // Predicated region
        $region101: #{tpu_custom_call.1} parent=75 // pred_check
          %p725 = pneg %p207
        $region102: #{tpu_custom_call.1} parent=75 // pred_check_branch
          %727 = sbr.rel (%p725) target = $region104
        $region103: #{tpu_custom_call.1} parent=75 // pred_region
          %728 = dma.done %s721, 512
        $region104: #{tpu_custom_call.1} parent=75 // pred_fallthru
          _
        %s729 = sand.u32 %s33, 1
        %s730 = scalar_lea.sflag [#allocation3], %s729
        %s731 = sand.u32 %s220, 1
        %s732 = scalar_lea.vmem [#allocation13], %s731
        // Predicated region
        $region105: #{tpu_custom_call.1} parent=75 // pred_check
          %p733 = pneg %p233
        $region106: #{tpu_custom_call.1} parent=75 // pred_check_branch
          %735 = sbr.rel (%p733) target = $region108
        $region107: #{tpu_custom_call.1} parent=75 // pred_region
          %736 = dma.done %s730, 16
        $region108: #{tpu_custom_call.1} parent=75 // pred_fallthru
          _
        %s737 = sand.u32 %s33, 1
        %s738 = scalar_lea.sflag [#allocation3], %s737
        %s739 = sand.u32 %s246, 1
        %s740 = smul.addr %s739, 24
        %s741 = scalar_lea.vmem [#allocation14], %s740
        // Predicated region
        $region109: #{tpu_custom_call.1} parent=75 // pred_check
          %p742 = pneg %p259
        $region110: #{tpu_custom_call.1} parent=75 // pred_check_branch
          %744 = sbr.rel (%p742) target = $region112
        $region111: #{tpu_custom_call.1} parent=75 // pred_region
          %745 = dma.done %s738, 384
        $region112: #{tpu_custom_call.1} parent=75 // pred_fallthru
          _
        %s746 = sand.u32 %s33, 1
        %s747 = scalar_lea.sflag [#allocation3], %s746
        %s748 = sand.u32 %s272, 1
        %s749 = scalar_lea.vmem [#allocation15], %s748
        // Predicated region
        $region113: #{tpu_custom_call.1} parent=75 // pred_check
          %p750 = pneg %p285
        $region114: #{tpu_custom_call.1} parent=75 // pred_check_branch
          %752 = sbr.rel (%p750) target = $region116
        $region115: #{tpu_custom_call.1} parent=75 // pred_region
          %753 = dma.done %s747, 16
        $region116: #{tpu_custom_call.1} parent=75 // pred_fallthru
          _
        %s754 = sand.u32 %s33, 1
        %s755 = scalar_lea.sflag [#allocation3], %s754
        %s756 = sand.u32 %s298, 1
        %s757 = smul.addr %s756, 24
        %s758 = scalar_lea.vmem [#allocation16], %s757
        // Predicated region
        $region117: #{tpu_custom_call.1} parent=75 // pred_check
          %p759 = pneg %p311
        $region118: #{tpu_custom_call.1} parent=75 // pred_check_branch
          %761 = sbr.rel (%p759) target = $region120
        $region119: #{tpu_custom_call.1} parent=75 // pred_region
          %762 = dma.done %s755, 384
        $region120: #{tpu_custom_call.1} parent=75 // pred_fallthru
          _
        %s763 = sand.u32 %s33, 1
        %s764 = scalar_lea.sflag [#allocation3], %s763
        %s765 = sand.u32 %s324, 1
        %s766 = scalar_lea.vmem [#allocation17], %s765
        // Predicated region
        $region121: #{tpu_custom_call.1} parent=75 // pred_check
          %p767 = pneg %p337
        $region122: #{tpu_custom_call.1} parent=75 // pred_check_branch
          %769 = sbr.rel (%p767) target = $region124
        $region123: #{tpu_custom_call.1} parent=75 // pred_region
          %770 = dma.done %s764, 16
        $region124: #{tpu_custom_call.1} parent=75 // pred_fallthru
          _
        %s771 = sand.u32 %s33, 1
        %s772 = scalar_lea.sflag [#allocation3], %s771
        %s773 = sand.u32 %s350, 1
        %s774 = smul.addr %s773, 64
        %s775 = scalar_lea.vmem [#allocation18], %s774
        // Predicated region
        $region125: #{tpu_custom_call.1} parent=75 // pred_check
          %p776 = pneg %p363
        $region126: #{tpu_custom_call.1} parent=75 // pred_check_branch
          %778 = sbr.rel (%p776) target = $region128
        $region127: #{tpu_custom_call.1} parent=75 // pred_region
          %779 = dma.done %s772, 1024
        $region128: #{tpu_custom_call.1} parent=75 // pred_fallthru
          _
        %s780 = sand.u32 %s33, 1
        %s781 = scalar_lea.sflag [#allocation3], %s780
        %s782 = sand.u32 %s376, 1
        %s783 = scalar_lea.vmem [#allocation19], %s782
        // Predicated region
        $region129: #{tpu_custom_call.1} parent=75 // pred_check
          %p784 = pneg %p389
        $region130: #{tpu_custom_call.1} parent=75 // pred_check_branch
          %786 = sbr.rel (%p784) target = $region132
        $region131: #{tpu_custom_call.1} parent=75 // pred_region
          %787 = dma.done %s781, 16
        $region132: #{tpu_custom_call.1} parent=75 // pred_fallthru
          _
        %s788 = sand.u32 %s33, 1
        %s789 = scalar_lea.sflag [#allocation3], %s788
        %s790 = sand.u32 %s53, 1
        %s791 = smul.addr %s790, 8
        %s792 = scalar_lea.vmem [#allocation2], %s791
        %p793 = pneg %p66
        %p794 = pneg %p63
        %p795 = pneg %p87
        %p796 = pneg %p84
        %p797 = pneg %p108
        %p798 = pneg %p105
        %p799 = pneg %p129
        %p800 = pneg %p126
        %s801 = sand.u32 %s33, 1
        %s802 = scalar_lea.sflag [#allocation3], %s801
        %s803 = sand.u32 %s142, 1
        %s804 = scalar_lea.vmem [#allocation10], %s803
        %p805 = pneg %p155
        %p806 = pneg %p152
        %s807 = sand.u32 %s33, 1
        %s808 = scalar_lea.sflag [#allocation3], %s807
        %s809 = sand.u32 %s168, 1
        %s810 = smul.addr %s809, 48
        %s811 = scalar_lea.vmem [#allocation11], %s810
        %p812 = pneg %p181
        %p813 = pneg %p178
        %s814 = sand.u32 %s33, 1
        %s815 = scalar_lea.sflag [#allocation3], %s814
        %s816 = sand.u32 %s194, 1
        %s817 = smul.addr %s816, 32
        %s818 = scalar_lea.vmem [#allocation12], %s817
        %p819 = pneg %p207
        %p820 = pneg %p204
        %s821 = sand.u32 %s33, 1
        %s822 = scalar_lea.sflag [#allocation3], %s821
        %s823 = sand.u32 %s220, 1
        %s824 = scalar_lea.vmem [#allocation13], %s823
        %p825 = pneg %p233
        %p826 = pneg %p230
        %s827 = sand.u32 %s33, 1
        %s828 = scalar_lea.sflag [#allocation3], %s827
        %s829 = sand.u32 %s246, 1
        %s830 = smul.addr %s829, 24
        %s831 = scalar_lea.vmem [#allocation14], %s830
        %p832 = pneg %p259
        %p833 = pneg %p256
        %s834 = sand.u32 %s33, 1
        %s835 = scalar_lea.sflag [#allocation3], %s834
        %s836 = sand.u32 %s272, 1
        %s837 = scalar_lea.vmem [#allocation15], %s836
        %p838 = pneg %p285
        %p839 = pneg %p282
        %s840 = sand.u32 %s33, 1
        %s841 = scalar_lea.sflag [#allocation3], %s840
        %s842 = sand.u32 %s298, 1
        %s843 = smul.addr %s842, 24
        %s844 = scalar_lea.vmem [#allocation16], %s843
        %p845 = pneg %p311
        %p846 = pneg %p308
        %s847 = sand.u32 %s33, 1
        %s848 = scalar_lea.sflag [#allocation3], %s847
        %s849 = sand.u32 %s324, 1
        %s850 = scalar_lea.vmem [#allocation17], %s849
        %p851 = pneg %p337
        %p852 = pneg %p334
        %s853 = sand.u32 %s33, 1
        %s854 = scalar_lea.sflag [#allocation3], %s853
        %s855 = sand.u32 %s350, 1
        %s856 = smul.addr %s855, 64
        %s857 = scalar_lea.vmem [#allocation18], %s856
        %p858 = pneg %p363
        %p859 = pneg %p360
        %s860 = sand.u32 %s33, 1
        %s861 = scalar_lea.sflag [#allocation3], %s860
        %s862 = sand.u32 %s376, 1
        %s863 = scalar_lea.vmem [#allocation19], %s862
        %p864 = pneg %p389
        %p865 = pneg %p386
        %p866 = pneg %p415
        %p867 = pneg %p412
        %s868 = sand.u32 %s402, 1
        %s869 = scalar_lea.sflag [#allocation4], %s868
        %s870 = sand.u32 %s402, 1
        %s871 = smul.addr %s870, 8
        %s872 = scalar_lea.vmem [#allocation20], %s871
        %p874 = scmp.eq.s32.totalorder %s38, 0
        // Predicated region
        $region133: #{tpu_custom_call.1} parent=75 // pred_check
          %p875 = pneg %p874
        $region134: #{tpu_custom_call.1} parent=75 // pred_check_branch
          %877 = sbr.rel (%p875) target = $region136
        $region135: #{tpu_custom_call.1} parent=75 // pred_region
          %v878 = vld [vmem:[%s686] sm:$0xff]
          %vm879 = vcmask 392192
          %880 = vst.msk [vmem:[%s872] sm:$0xff] %vm879, %v878
        $region136: #{tpu_custom_call.1} parent=75 // pred_fallthru
          _
        %v881 = vld [vmem:[%s872] sm:$0xff]
        %v882 = vld [vmem:[%s706] sm:$0x1]
        %v883 = vmul.f32 %v881, %v881
        %vm884 = vcmask 392192
        %v885 = vsel %vm884, %v883, 0.0
        %886 = vadd.xlane.f32.xlu0 %v885
        %v887 = vpop.xlane.xlu0 %886
        %v888 = vrcp.pop 48.0
        %v889 = vmul.f32 %v887, %v888
        %v890 = vadd.f32 %v889, 1.1920929e-07
        %v891 = vrsqrt.pop %v890
        %v892 = vmul.f32 %v881, %v891
        %v894 = vlaneseq
        %v895 = vshrl.u32 %v894, 7
        %v896 = vsub.s32 0, %v895
        %v897 = vrot.slane %v882, %v896
        %v899 = vmul.f32 %v892, %v897
        %v900 = vpack.c.bf16 %v899, %v899
        %v901 = vld [vmem:[%s715] sm:$0xff]
        %v902 = vld [vmem:[%s715 + $0x8] sm:$0xff]
        %v903 = vld [vmem:[%s715 + $0x10] sm:$0xff]
        %v904 = vld [vmem:[%s715 + $0x18] sm:$0xff]
        %v905 = vld [vmem:[%s715 + $0x20] sm:$0xff]
        %v906 = vld [vmem:[%s715 + $0x28] sm:$0xff]
        %v913 = vunpack.c.l.b16 %v901
        %v914 = vunpack.c.h.b16 %v901
        %v915 = vunpack.c.l.b16 %v902
        %v916 = vunpack.c.h.b16 %v902
        %v917 = vunpack.c.l.b16 %v903
        %v918 = vunpack.c.h.b16 %v903
        %v919 = vunpack.c.l.b16 %v904
        %v920 = vunpack.c.h.b16 %v904
        %v921 = vunpack.c.l.b16 %v905
        %v922 = vunpack.c.h.b16 %v905
        %v923 = vunpack.c.l.b16 %v906
        %v924 = vunpack.c.h.b16 %v906
        %v925 = vpack.c.b16 %v915, %v913
        %v926 = vpack.c.b16 %v916, %v914
        %v927 = vpack.c.b16 %v919, %v917
        %v928 = vpack.c.b16 %v920, %v918
        %v929 = vpack.c.b16 %v923, %v921
        %v930 = vpack.c.b16 %v924, %v922
        %v938 = vsel %vm884, %v900, 0
        %940 = vmatprep.subr.bf16.mxu0 %v926
        %941 = vmatpush1.bf16.msra.mxu0 %v925
        %942 = vmatprep.subr.bf16.mxu0 %v928
        %943 = vmatpush1.bf16.msra.mxu0 %v927
        %944 = vmatprep.subr.bf16.mxu0 %v930
        %945 = vmatpush1.bf16.msra.mxu0 %v929
        %946 = vmatprep.subr.bf16.mxu0 0
        %947 = vmatpush1.bf16.msra.mxu0 0
        %948 = vmatprep.subr.bf16.mxu0 0
        %949 = vmatpush1.bf16.msra.mxu0 0
        %950 = vmatprep.subr.bf16.mxu0 0
        %951 = vmatpush1.bf16.msra.mxu0 0
        %952 = vmatprep.subr.bf16.mxu0 0
        %953 = vmatpush1.bf16.msra.mxu0 0
        %954 = vmatprep.subr.bf16.mxu0 0
        %955 = vmatpush1.bf16.msra.mxu0 0
        %956 = vmatprep.subr.bf16.mxu0 0
        %957 = vmatpush1.bf16.msra.mxu0 0
        %958 = vmatprep.subr.bf16.mxu0 0
        %959 = vmatpush1.bf16.msra.mxu0 0
        %960 = vmatprep.subr.bf16.mxu0 0
        %961 = vmatpush1.bf16.msra.mxu0 0
        %962 = vmatprep.subr.bf16.mxu0 0
        %963 = vmatpush1.bf16.msra.mxu0 0
        %964 = vmatprep.subr.bf16.mxu0 0
        %965 = vmatpush1.bf16.msra.mxu0 0
        %966 = vmatprep.subr.bf16.mxu0 0
        %967 = vmatpush1.bf16.msra.mxu0 0
        %968 = vmatprep.subr.bf16.mxu0 0
        %969 = vmatpush1.bf16.msra.mxu0 0
        %970 = vmatprep.subr.bf16.mxu0 0
        %971 = vmatpush1.bf16.msra.mxu0 0
        %972 = vmatprep.mubr.bf16.mxu0 0
        %973 = vmatmul.mubr.bf16.gmra.mrb[0].mxu0 %v938
        %v974 = vpop.f32.mrb[0].mxu0
        %v975 = vadd.f32 0.0, %v974
        %v976 = vpop.f32.mrb[0].mxu0
        %v977 = vadd.f32 0.0, %v976
        %v978 = vpop.f32.mrb[0].mxu0
        %v979 = vpop.f32.mrb[0].mxu0
        %980 = vdwg.mxu0
        %982 = vrot.lane.b32.xlu0 %v975, 112
        %v983 = vpop.permute.xlu0 %982
        %985 = vrot.lane.b32.xlu0 %v975, 96
        %v986 = vpop.permute.xlu0 %985
        %988 = vrot.lane.b32.xlu0 %v975, 80
        %v989 = vpop.permute.xlu0 %988
        %992 = vrot.lane.b32.xlu0 %v977, 112
        %v993 = vpop.permute.xlu0 %992
        %995 = vrot.lane.b32.xlu0 %v977, 96
        %v996 = vpop.permute.xlu0 %995
        %998 = vrot.lane.b32.xlu0 %v977, 80
        %v999 = vpop.permute.xlu0 %998
        %v1001 = vld [vmem:[#allocation5] sm:$0xff]
        %v1002 = vld [vmem:[#allocation7] sm:$0xff]
        %v1003 = vmul.f32 %v975, %v1001
        %v1004 = vmul.f32 %v983, %v1001
        %v1005 = vmul.f32 %v986, %v1001
        %v1006 = vmul.f32 %v989, %v1001
        %v1007 = vsub.f32 0.0, %v975
        %v1008 = vsub.f32 0.0, %v983
        %v1009 = vsub.f32 0.0, %v986
        %v1010 = vsub.f32 0.0, %v989
        %1015 = vrot.lane.b32.xlu0 %v1007, 120
        %v1016 = vpop.permute.xlu0 %1015
        %1017 = vrot.lane.b32.xlu0 %v1008, 120
        %v1018 = vpop.permute.xlu0 %1017
        %1019 = vrot.lane.b32.xlu0 %v1009, 120
        %v1020 = vpop.permute.xlu0 %1019
        %1021 = vrot.lane.b32.xlu0 %v1010, 120
        %v1022 = vpop.permute.xlu0 %1021
        %1027 = vrot.lane.b32.xlu0 %v975, 8
        %v1028 = vpop.permute.xlu0 %1027
        %1029 = vrot.lane.b32.xlu0 %v983, 8
        %v1030 = vpop.permute.xlu0 %1029
        %1031 = vrot.lane.b32.xlu0 %v986, 8
        %v1032 = vpop.permute.xlu0 %1031
        %1033 = vrot.lane.b32.xlu0 %v989, 8
        %v1034 = vpop.permute.xlu0 %1033
        %vm1039 = vcmask 64512
        %v1040 = vsel %vm1039, %v1016, %v1028
        %v1041 = vsel %vm1039, %v1018, %v1030
        %v1042 = vsel %vm1039, %v1020, %v1032
        %v1043 = vsel %vm1039, %v1022, %v1034
        %v1044 = vmul.f32 %v1040, %v1002
        %v1045 = vmul.f32 %v1041, %v1002
        %v1046 = vmul.f32 %v1042, %v1002
        %v1047 = vmul.f32 %v1043, %v1002
        %v1048 = vadd.f32 %v1003, %v1044
        %v1049 = vadd.f32 %v1004, %v1045
        %v1050 = vadd.f32 %v1005, %v1046
        %v1051 = vadd.f32 %v1006, %v1047
        %1053 = vrot.lane.b32.xlu0 %v1001, 64
        %v1054 = vpop.permute.xlu0 %1053
        %v1056 = vmul.f32 %v975, %v1054
        %v1057 = vmul.f32 %v983, %v1054
        %v1058 = vmul.f32 %v986, %v1054
        %v1059 = vmul.f32 %v989, %v1054
        %1060 = vrot.lane.b32.xlu0 %v1007, 56
        %v1061 = vpop.permute.xlu0 %1060
        %1062 = vrot.lane.b32.xlu0 %v1008, 56
        %v1063 = vpop.permute.xlu0 %1062
        %1064 = vrot.lane.b32.xlu0 %v1009, 56
        %v1065 = vpop.permute.xlu0 %1064
        %1066 = vrot.lane.b32.xlu0 %v1010, 56
        %v1067 = vpop.permute.xlu0 %1066
        %1072 = vrot.lane.b32.xlu0 %v975, 72
        %v1073 = vpop.permute.xlu0 %1072
        %1074 = vrot.lane.b32.xlu0 %v983, 72
        %v1075 = vpop.permute.xlu0 %1074
        %1076 = vrot.lane.b32.xlu0 %v986, 72
        %v1077 = vpop.permute.xlu0 %1076
        %1078 = vrot.lane.b32.xlu0 %v989, 72
        %v1079 = vpop.permute.xlu0 %1078
        %v1084 = vsel %vm1039, %v1061, %v1073
        %v1085 = vsel %vm1039, %v1063, %v1075
        %v1086 = vsel %vm1039, %v1065, %v1077
        %v1087 = vsel %vm1039, %v1067, %v1079
        %v1088 = vmul.f32 %v1084, %v1002
        %v1089 = vmul.f32 %v1085, %v1002
        %v1090 = vmul.f32 %v1086, %v1002
        %v1091 = vmul.f32 %v1087, %v1002
        %1096 = vrot.lane.b32.xlu0 %v1088, 64
        %v1097 = vpop.permute.xlu0 %1096
        %1098 = vrot.lane.b32.xlu0 %v1089, 64
        %v1099 = vpop.permute.xlu0 %1098
        %1100 = vrot.lane.b32.xlu0 %v1090, 64
        %v1101 = vpop.permute.xlu0 %1100
        %1102 = vrot.lane.b32.xlu0 %v1091, 64
        %v1103 = vpop.permute.xlu0 %1102
        %v1108 = vadd.f32 %v1056, %v1097
        %v1109 = vadd.f32 %v1057, %v1099
        %v1110 = vadd.f32 %v1058, %v1101
        %v1111 = vadd.f32 %v1059, %v1103
        %v1112 = vlaneseq
        %v1113 = vshrl.u32 %v1112, 7
        %v1114 = vlaneseq
        %v1115 = vand.u32 %v1114, 127
        %vm1116 = vcmp.gt.s32.totalorder %v1115, %v1113
        %v1117 = vpack.c.bf16 %v1048, %v1048
        %v1118 = vpack.c.bf16 %v1049, %v1049
        %v1119 = vpack.c.bf16 %v1050, %v1050
        %v1120 = vpack.c.bf16 %v1051, %v1051
        %v1121 = vpack.c.bf16 %v1108, %v1108
        %v1122 = vpack.c.bf16 %v1109, %v1109
        %v1123 = vpack.c.bf16 %v1110, %v1110
        %v1124 = vpack.c.bf16 %v1111, %v1111
        %1126 = vrot.lane.b32.xlu0 %v1121, 64
        %v1127 = vpop.permute.xlu0 %1126
        %vm1128 = vcmask 130048
        %v1130 = vsel %vm1128, %v1117, 0
        %v1133 = vsel %vm1128, %v1127, 0
        %1135 = vmatprep.subr.bf16.mxu0 0
        %1136 = vmatpush1.bf16.xpose.msra.mxu0 %v1133
        %1137 = vmatprep.subr.bf16.mxu0 0
        %1138 = vmatpush1.bf16.xpose.msra.mxu0 0
        %1139 = vmatprep.subr.bf16.mxu0 0
        %1140 = vmatpush1.bf16.xpose.msra.mxu0 0
        %1141 = vmatprep.subr.bf16.mxu0 0
        %1142 = vmatpush1.bf16.xpose.msra.mxu0 0
        %1143 = vmatprep.subr.bf16.mxu0 0
        %1144 = vmatpush1.bf16.xpose.msra.mxu0 0
        %1145 = vmatprep.subr.bf16.mxu0 0
        %1146 = vmatpush1.bf16.xpose.msra.mxu0 0
        %1147 = vmatprep.subr.bf16.mxu0 0
        %1148 = vmatpush1.bf16.xpose.msra.mxu0 0
        %1149 = vmatprep.subr.bf16.mxu0 0
        %1150 = vmatpush1.bf16.xpose.msra.mxu0 0
        %1151 = vmatprep.subr.bf16.mxu0 0
        %1152 = vmatpush1.bf16.xpose.msra.mxu0 0
        %1153 = vmatprep.subr.bf16.mxu0 0
        %1154 = vmatpush1.bf16.xpose.msra.mxu0 0
        %1155 = vmatprep.subr.bf16.mxu0 0
        %1156 = vmatpush1.bf16.xpose.msra.mxu0 0
        %1157 = vmatprep.subr.bf16.mxu0 0
        %1158 = vmatpush1.bf16.xpose.msra.mxu0 0
        %1159 = vmatprep.subr.bf16.mxu0 0
        %1160 = vmatpush1.bf16.xpose.msra.mxu0 0
        %1161 = vmatprep.subr.bf16.mxu0 0
        %1162 = vmatpush1.bf16.xpose.msra.mxu0 0
        %1163 = vmatprep.subr.bf16.mxu0 0
        %1164 = vmatpush1.bf16.xpose.msra.mxu0 0
        %1165 = vmatprep.subr.bf16.mxu0 0
        %1166 = vmatpush1.bf16.xpose.msra.mxu0 0
        %1167 = vmatprep.mubr.bf16.mxu0 0
        %1168 = vmatmul.mubr.bf16.gmra.mrb[0].mxu0 %v1130
        %v1169 = vpop.f32.mrb[0].mxu0
        %v1170 = vadd.f32 0.0, %v1169
        %v1171 = vpop.f32.mrb[0].mxu0
        %v1172 = vpop.f32.mrb[0].mxu0
        %v1173 = vpop.f32.mrb[0].mxu0
        %1174 = vdwg.mxu0
        %1176 = vrot.lane.b32.xlu0 %v1122, 64
        %v1177 = vpop.permute.xlu0 %1176
        %v1179 = vsel %vm1128, %v1118, 0
        %v1182 = vsel %vm1128, %v1177, 0
        %1184 = vmatprep.subr.bf16.mxu0 0
        %1185 = vmatpush1.bf16.xpose.msra.mxu0 %v1182
        %1186 = vmatprep.subr.bf16.mxu0 0
        %1187 = vmatpush1.bf16.xpose.msra.mxu0 0
        %1188 = vmatprep.subr.bf16.mxu0 0
        %1189 = vmatpush1.bf16.xpose.msra.mxu0 0
        %1190 = vmatprep.subr.bf16.mxu0 0
        %1191 = vmatpush1.bf16.xpose.msra.mxu0 0
        %1192 = vmatprep.subr.bf16.mxu0 0
        %1193 = vmatpush1.bf16.xpose.msra.mxu0 0
        %1194 = vmatprep.subr.bf16.mxu0 0
        %1195 = vmatpush1.bf16.xpose.msra.mxu0 0
        %1196 = vmatprep.subr.bf16.mxu0 0
        %1197 = vmatpush1.bf16.xpose.msra.mxu0 0
        %1198 = vmatprep.subr.bf16.mxu0 0
        %1199 = vmatpush1.bf16.xpose.msra.mxu0 0
        %1200 = vmatprep.subr.bf16.mxu0 0
        %1201 = vmatpush1.bf16.xpose.msra.mxu0 0
        %1202 = vmatprep.subr.bf16.mxu0 0
        %1203 = vmatpush1.bf16.xpose.msra.mxu0 0
        %1204 = vmatprep.subr.bf16.mxu0 0
        %1205 = vmatpush1.bf16.xpose.msra.mxu0 0
        %1206 = vmatprep.subr.bf16.mxu0 0
        %1207 = vmatpush1.bf16.xpose.msra.mxu0 0
        %1208 = vmatprep.subr.bf16.mxu0 0
        %1209 = vmatpush1.bf16.xpose.msra.mxu0 0
        %1210 = vmatprep.subr.bf16.mxu0 0
        %1211 = vmatpush1.bf16.xpose.msra.mxu0 0
        %1212 = vmatprep.subr.bf16.mxu0 0
        %1213 = vmatpush1.bf16.xpose.msra.mxu0 0
        %1214 = vmatprep.subr.bf16.mxu0 0
        %1215 = vmatpush1.bf16.xpose.msra.mxu0 0
        %1216 = vmatprep.mubr.bf16.mxu0 0
        %1217 = vmatmul.mubr.bf16.gmra.mrb[0].mxu0 %v1179
        %v1218 = vpop.f32.mrb[0].mxu0
        %v1219 = vadd.f32 0.0, %v1218
        %v1220 = vpop.f32.mrb[0].mxu0
        %v1221 = vpop.f32.mrb[0].mxu0
        %v1222 = vpop.f32.mrb[0].mxu0
        %1223 = vdwg.mxu0
        %1225 = vrot.lane.b32.xlu0 %v1123, 64
        %v1226 = vpop.permute.xlu0 %1225
        %v1228 = vsel %vm1128, %v1119, 0
        %v1231 = vsel %vm1128, %v1226, 0
        %1233 = vmatprep.subr.bf16.mxu0 0
        %1234 = vmatpush1.bf16.xpose.msra.mxu0 %v1231
        %1235 = vmatprep.subr.bf16.mxu0 0
        %1236 = vmatpush1.bf16.xpose.msra.mxu0 0
        %1237 = vmatprep.subr.bf16.mxu0 0
        %1238 = vmatpush1.bf16.xpose.msra.mxu0 0
        %1239 = vmatprep.subr.bf16.mxu0 0
        %1240 = vmatpush1.bf16.xpose.msra.mxu0 0
        %1241 = vmatprep.subr.bf16.mxu0 0
        %1242 = vmatpush1.bf16.xpose.msra.mxu0 0
        %1243 = vmatprep.subr.bf16.mxu0 0
        %1244 = vmatpush1.bf16.xpose.msra.mxu0 0
        %1245 = vmatprep.subr.bf16.mxu0 0
        %1246 = vmatpush1.bf16.xpose.msra.mxu0 0
        %1247 = vmatprep.subr.bf16.mxu0 0
        %1248 = vmatpush1.bf16.xpose.msra.mxu0 0
        %1249 = vmatprep.subr.bf16.mxu0 0
        %1250 = vmatpush1.bf16.xpose.msra.mxu0 0
        %1251 = vmatprep.subr.bf16.mxu0 0
        %1252 = vmatpush1.bf16.xpose.msra.mxu0 0
        %1253 = vmatprep.subr.bf16.mxu0 0
        %1254 = vmatpush1.bf16.xpose.msra.mxu0 0
        %1255 = vmatprep.subr.bf16.mxu0 0
        %1256 = vmatpush1.bf16.xpose.msra.mxu0 0
        %1257 = vmatprep.subr.bf16.mxu0 0
        %1258 = vmatpush1.bf16.xpose.msra.mxu0 0
        %1259 = vmatprep.subr.bf16.mxu0 0
        %1260 = vmatpush1.bf16.xpose.msra.mxu0 0
        %1261 = vmatprep.subr.bf16.mxu0 0
        %1262 = vmatpush1.bf16.xpose.msra.mxu0 0
        %1263 = vmatprep.subr.bf16.mxu0 0
        %1264 = vmatpush1.bf16.xpose.msra.mxu0 0
        %1265 = vmatprep.mubr.bf16.mxu0 0
        %1266 = vmatmul.mubr.bf16.gmra.mrb[0].mxu0 %v1228
        %v1267 = vpop.f32.mrb[0].mxu0
        %v1268 = vadd.f32 0.0, %v1267
        %v1269 = vpop.f32.mrb[0].mxu0
        %v1270 = vpop.f32.mrb[0].mxu0
        %v1271 = vpop.f32.mrb[0].mxu0
        %1272 = vdwg.mxu0
        %1274 = vrot.lane.b32.xlu0 %v1124, 64
        %v1275 = vpop.permute.xlu0 %1274
        %v1277 = vsel %vm1128, %v1120, 0
        %v1280 = vsel %vm1128, %v1275, 0
        %1282 = vmatprep.subr.bf16.mxu0 0
        %1283 = vmatpush1.bf16.xpose.msra.mxu0 %v1280
        %1284 = vmatprep.subr.bf16.mxu0 0
        %1285 = vmatpush1.bf16.xpose.msra.mxu0 0
        %1286 = vmatprep.subr.bf16.mxu0 0
        %1287 = vmatpush1.bf16.xpose.msra.mxu0 0
        %1288 = vmatprep.subr.bf16.mxu0 0
        %1289 = vmatpush1.bf16.xpose.msra.mxu0 0
        %1290 = vmatprep.subr.bf16.mxu0 0
        %1291 = vmatpush1.bf16.xpose.msra.mxu0 0
        %1292 = vmatprep.subr.bf16.mxu0 0
        %1293 = vmatpush1.bf16.xpose.msra.mxu0 0
        %1294 = vmatprep.subr.bf16.mxu0 0
        %1295 = vmatpush1.bf16.xpose.msra.mxu0 0
        %1296 = vmatprep.subr.bf16.mxu0 0
        %1297 = vmatpush1.bf16.xpose.msra.mxu0 0
        %1298 = vmatprep.subr.bf16.mxu0 0
        %1299 = vmatpush1.bf16.xpose.msra.mxu0 0
        %1300 = vmatprep.subr.bf16.mxu0 0
        %1301 = vmatpush1.bf16.xpose.msra.mxu0 0
        %1302 = vmatprep.subr.bf16.mxu0 0
        %1303 = vmatpush1.bf16.xpose.msra.mxu0 0
        %1304 = vmatprep.subr.bf16.mxu0 0
        %1305 = vmatpush1.bf16.xpose.msra.mxu0 0
        %1306 = vmatprep.subr.bf16.mxu0 0
        %1307 = vmatpush1.bf16.xpose.msra.mxu0 0
        %1308 = vmatprep.subr.bf16.mxu0 0
        %1309 = vmatpush1.bf16.xpose.msra.mxu0 0
        %1310 = vmatprep.subr.bf16.mxu0 0
        %1311 = vmatpush1.bf16.xpose.msra.mxu0 0
        %1312 = vmatprep.subr.bf16.mxu0 0
        %1313 = vmatpush1.bf16.xpose.msra.mxu0 0
        %1314 = vmatprep.mubr.bf16.mxu0 0
        %1315 = vmatmul.mubr.bf16.gmra.mrb[0].mxu0 %v1277
        %v1316 = vpop.f32.mrb[0].mxu0
        %v1317 = vadd.f32 0.0, %v1316
        %v1318 = vpop.f32.mrb[0].mxu0
        %v1319 = vpop.f32.mrb[0].mxu0
        %v1320 = vpop.f32.mrb[0].mxu0
        %1321 = vdwg.mxu0
        %v1322 = vsel %vm1116, 1, 0
        %vm1323 = vcmp.eq.s32.totalorder %v1322, 1
        %v1324 = vsel %vm1323, -2.3819763e+38, %v1170
        %v1325 = vsel %vm1323, -2.3819763e+38, %v1219
        %v1326 = vsel %vm1323, -2.3819763e+38, %v1268
        %v1327 = vsel %vm1323, -2.3819763e+38, %v1317
        %v1328 = vsel %vm1039, %v1324, -inf
        %1329 = vmax.xlane.f32.xlu0 %v1328
        %v1330 = vpop.xlane.xlu0 %1329
        %v1331 = vsel %vm1039, %v1325, -inf
        %1332 = vmax.xlane.f32.xlu0 %v1331
        %v1333 = vpop.xlane.xlu0 %1332
        %v1334 = vsel %vm1039, %v1326, -inf
        %1335 = vmax.xlane.f32.xlu0 %v1334
        %v1336 = vpop.xlane.xlu0 %1335
        %v1337 = vsel %vm1039, %v1327, -inf
        %1338 = vmax.xlane.f32.xlu0 %v1337
        %v1339 = vpop.xlane.xlu0 %1338
        %v1340 = vsub.f32 %v1324, %v1330
        %v1341 = vsub.f32 %v1325, %v1333
        %v1342 = vsub.f32 %v1326, %v1336
        %v1343 = vsub.f32 %v1327, %v1339
        %v1344 = vmul.f32 %v1340, 1.442695
        %v1345 = vpow.pop %v1344
        %v1346 = vmul.f32 %v1341, 1.442695
        %v1347 = vpow.pop %v1346
        %v1348 = vmul.f32 %v1342, 1.442695
        %v1349 = vpow.pop %v1348
        %v1350 = vmul.f32 %v1343, 1.442695
        %v1351 = vpow.pop %v1350
        %v1352 = vsel %vm1039, %v1345, 0.0
        %1353 = vadd.xlane.f32.xlu0 %v1352
        %v1354 = vpop.xlane.xlu0 %1353
        %v1355 = vsel %vm1039, %v1347, 0.0
        %1356 = vadd.xlane.f32.xlu0 %v1355
        %v1357 = vpop.xlane.xlu0 %1356
        %v1358 = vsel %vm1039, %v1349, 0.0
        %1359 = vadd.xlane.f32.xlu0 %v1358
        %v1360 = vpop.xlane.xlu0 %1359
        %v1361 = vsel %vm1039, %v1351, 0.0
        %1362 = vadd.xlane.f32.xlu0 %v1361
        %v1363 = vpop.xlane.xlu0 %1362
        %v1364 = vrcp.pop %v1354
        %v1365 = vrcp.pop %v1357
        %v1366 = vrcp.pop %v1360
        %v1367 = vrcp.pop %v1363
        %v1368 = vmul.f32 %v1345, %v1364
        %v1369 = vmul.f32 %v1347, %v1365
        %v1370 = vmul.f32 %v1349, %v1366
        %v1371 = vmul.f32 %v1351, %v1367
        %v1372 = vpack.c.bf16 %v1368, %v1368
        %v1373 = vpack.c.bf16 %v1369, %v1369
        %v1374 = vpack.c.bf16 %v1370, %v1370
        %v1375 = vpack.c.bf16 %v1371, %v1371
        %v1376 = vpack.c.bf16 %v977, %v977
        %v1377 = vpack.c.bf16 %v993, %v993
        %v1378 = vpack.c.bf16 %v996, %v996
        %v1379 = vpack.c.bf16 %v999, %v999
        %v1381 = vsel %vm1039, %v1372, 0
        %vm1383 = vcmask 1043456
        %v1385 = vsel %vm1383, %v1376, 0
        %1387 = vmatprep.subr.bf16.mxu0 0
        %1388 = vmatpush1.bf16.msra.mxu0 %v1385
        %1389 = vmatprep.subr.bf16.mxu0 0
        %1390 = vmatpush1.bf16.msra.mxu0 0
        %1391 = vmatprep.subr.bf16.mxu0 0
        %1392 = vmatpush1.bf16.msra.mxu0 0
        %1393 = vmatprep.subr.bf16.mxu0 0
        %1394 = vmatpush1.bf16.msra.mxu0 0
        %1395 = vmatprep.subr.bf16.mxu0 0
        %1396 = vmatpush1.bf16.msra.mxu0 0
        %1397 = vmatprep.subr.bf16.mxu0 0
        %1398 = vmatpush1.bf16.msra.mxu0 0
        %1399 = vmatprep.subr.bf16.mxu0 0
        %1400 = vmatpush1.bf16.msra.mxu0 0
        %1401 = vmatprep.subr.bf16.mxu0 0
        %1402 = vmatpush1.bf16.msra.mxu0 0
        %1403 = vmatprep.subr.bf16.mxu0 0
        %1404 = vmatpush1.bf16.msra.mxu0 0
        %1405 = vmatprep.subr.bf16.mxu0 0
        %1406 = vmatpush1.bf16.msra.mxu0 0
        %1407 = vmatprep.subr.bf16.mxu0 0
        %1408 = vmatpush1.bf16.msra.mxu0 0
        %1409 = vmatprep.subr.bf16.mxu0 0
        %1410 = vmatpush1.bf16.msra.mxu0 0
        %1411 = vmatprep.subr.bf16.mxu0 0
        %1412 = vmatpush1.bf16.msra.mxu0 0
        %1413 = vmatprep.subr.bf16.mxu0 0
        %1414 = vmatpush1.bf16.msra.mxu0 0
        %1415 = vmatprep.subr.bf16.mxu0 0
        %1416 = vmatpush1.bf16.msra.mxu0 0
        %1417 = vmatprep.subr.bf16.mxu0 0
        %1418 = vmatpush1.bf16.msra.mxu0 0
        %1419 = vmatprep.mubr.bf16.mxu0 0
        %1420 = vmatmul.mubr.bf16.gmra.mrb[0].mxu0 %v1381
        %v1421 = vpop.f32.mrb[0].mxu0
        %v1422 = vadd.f32 0.0, %v1421
        %v1423 = vpop.f32.mrb[0].mxu0
        %v1424 = vpop.f32.mrb[0].mxu0
        %v1425 = vpop.f32.mrb[0].mxu0
        %1426 = vdwg.mxu0
        %v1428 = vsel %vm1039, %v1373, 0
        %v1431 = vsel %vm1383, %v1377, 0
        %1433 = vmatprep.subr.bf16.mxu0 0
        %1434 = vmatpush1.bf16.msra.mxu0 %v1431
        %1435 = vmatprep.subr.bf16.mxu0 0
        %1436 = vmatpush1.bf16.msra.mxu0 0
        %1437 = vmatprep.subr.bf16.mxu0 0
        %1438 = vmatpush1.bf16.msra.mxu0 0
        %1439 = vmatprep.subr.bf16.mxu0 0
        %1440 = vmatpush1.bf16.msra.mxu0 0
        %1441 = vmatprep.subr.bf16.mxu0 0
        %1442 = vmatpush1.bf16.msra.mxu0 0
        %1443 = vmatprep.subr.bf16.mxu0 0
        %1444 = vmatpush1.bf16.msra.mxu0 0
        %1445 = vmatprep.subr.bf16.mxu0 0
        %1446 = vmatpush1.bf16.msra.mxu0 0
        %1447 = vmatprep.subr.bf16.mxu0 0
        %1448 = vmatpush1.bf16.msra.mxu0 0
        %1449 = vmatprep.subr.bf16.mxu0 0
        %1450 = vmatpush1.bf16.msra.mxu0 0
        %1451 = vmatprep.subr.bf16.mxu0 0
        %1452 = vmatpush1.bf16.msra.mxu0 0
        %1453 = vmatprep.subr.bf16.mxu0 0
        %1454 = vmatpush1.bf16.msra.mxu0 0
        %1455 = vmatprep.subr.bf16.mxu0 0
        %1456 = vmatpush1.bf16.msra.mxu0 0
        %1457 = vmatprep.subr.bf16.mxu0 0
        %1458 = vmatpush1.bf16.msra.mxu0 0
        %1459 = vmatprep.subr.bf16.mxu0 0
        %1460 = vmatpush1.bf16.msra.mxu0 0
        %1461 = vmatprep.subr.bf16.mxu0 0
        %1462 = vmatpush1.bf16.msra.mxu0 0
        %1463 = vmatprep.subr.bf16.mxu0 0
        %1464 = vmatpush1.bf16.msra.mxu0 0
        %1465 = vmatprep.mubr.bf16.mxu0 0
        %1466 = vmatmul.mubr.bf16.gmra.mrb[0].mxu0 %v1428
        %v1467 = vpop.f32.mrb[0].mxu0
        %v1468 = vadd.f32 0.0, %v1467
        %v1469 = vpop.f32.mrb[0].mxu0
        %v1470 = vpop.f32.mrb[0].mxu0
        %v1471 = vpop.f32.mrb[0].mxu0
        %1472 = vdwg.mxu0
        %v1474 = vsel %vm1039, %v1374, 0
        %v1477 = vsel %vm1383, %v1378, 0
        %1479 = vmatprep.subr.bf16.mxu0 0
        %1480 = vmatpush1.bf16.msra.mxu0 %v1477
        %1481 = vmatprep.subr.bf16.mxu0 0
        %1482 = vmatpush1.bf16.msra.mxu0 0
        %1483 = vmatprep.subr.bf16.mxu0 0
        %1484 = vmatpush1.bf16.msra.mxu0 0
        %1485 = vmatprep.subr.bf16.mxu0 0
        %1486 = vmatpush1.bf16.msra.mxu0 0
        %1487 = vmatprep.subr.bf16.mxu0 0
        %1488 = vmatpush1.bf16.msra.mxu0 0
        %1489 = vmatprep.subr.bf16.mxu0 0
        %1490 = vmatpush1.bf16.msra.mxu0 0
        %1491 = vmatprep.subr.bf16.mxu0 0
        %1492 = vmatpush1.bf16.msra.mxu0 0
        %1493 = vmatprep.subr.bf16.mxu0 0
        %1494 = vmatpush1.bf16.msra.mxu0 0
        %1495 = vmatprep.subr.bf16.mxu0 0
        %1496 = vmatpush1.bf16.msra.mxu0 0
        %1497 = vmatprep.subr.bf16.mxu0 0
        %1498 = vmatpush1.bf16.msra.mxu0 0
        %1499 = vmatprep.subr.bf16.mxu0 0
        %1500 = vmatpush1.bf16.msra.mxu0 0
        %1501 = vmatprep.subr.bf16.mxu0 0
        %1502 = vmatpush1.bf16.msra.mxu0 0
        %1503 = vmatprep.subr.bf16.mxu0 0
        %1504 = vmatpush1.bf16.msra.mxu0 0
        %1505 = vmatprep.subr.bf16.mxu0 0
        %1506 = vmatpush1.bf16.msra.mxu0 0
        %1507 = vmatprep.subr.bf16.mxu0 0
        %1508 = vmatpush1.bf16.msra.mxu0 0
        %1509 = vmatprep.subr.bf16.mxu0 0
        %1510 = vmatpush1.bf16.msra.mxu0 0
        %1511 = vmatprep.mubr.bf16.mxu0 0
        %1512 = vmatmul.mubr.bf16.gmra.mrb[0].mxu0 %v1474
        %v1513 = vpop.f32.mrb[0].mxu0
        %v1514 = vadd.f32 0.0, %v1513
        %v1515 = vpop.f32.mrb[0].mxu0
        %v1516 = vpop.f32.mrb[0].mxu0
        %v1517 = vpop.f32.mrb[0].mxu0
        %1518 = vdwg.mxu0
        %v1520 = vsel %vm1039, %v1375, 0
        %v1523 = vsel %vm1383, %v1379, 0
        %1525 = vmatprep.subr.bf16.mxu0 0
        %1526 = vmatpush1.bf16.msra.mxu0 %v1523
        %1527 = vmatprep.subr.bf16.mxu0 0
        %1528 = vmatpush1.bf16.msra.mxu0 0
        %1529 = vmatprep.subr.bf16.mxu0 0
        %1530 = vmatpush1.bf16.msra.mxu0 0
        %1531 = vmatprep.subr.bf16.mxu0 0
        %1532 = vmatpush1.bf16.msra.mxu0 0
        %1533 = vmatprep.subr.bf16.mxu0 0
        %1534 = vmatpush1.bf16.msra.mxu0 0
        %1535 = vmatprep.subr.bf16.mxu0 0
        %1536 = vmatpush1.bf16.msra.mxu0 0
        %1537 = vmatprep.subr.bf16.mxu0 0
        %1538 = vmatpush1.bf16.msra.mxu0 0
        %1539 = vmatprep.subr.bf16.mxu0 0
        %1540 = vmatpush1.bf16.msra.mxu0 0
        %1541 = vmatprep.subr.bf16.mxu0 0
        %1542 = vmatpush1.bf16.msra.mxu0 0
        %1543 = vmatprep.subr.bf16.mxu0 0
        %1544 = vmatpush1.bf16.msra.mxu0 0
        %1545 = vmatprep.subr.bf16.mxu0 0
        %1546 = vmatpush1.bf16.msra.mxu0 0
        %1547 = vmatprep.subr.bf16.mxu0 0
        %1548 = vmatpush1.bf16.msra.mxu0 0
        %1549 = vmatprep.subr.bf16.mxu0 0
        %1550 = vmatpush1.bf16.msra.mxu0 0
        %1551 = vmatprep.subr.bf16.mxu0 0
        %1552 = vmatpush1.bf16.msra.mxu0 0
        %1553 = vmatprep.subr.bf16.mxu0 0
        %1554 = vmatpush1.bf16.msra.mxu0 0
        %1555 = vmatprep.subr.bf16.mxu0 0
        %1556 = vmatpush1.bf16.msra.mxu0 0
        %1557 = vmatprep.mubr.bf16.mxu0 0
        %1558 = vmatmul.mubr.bf16.gmra.mrb[0].mxu0 %v1520
        %v1559 = vpop.f32.mrb[0].mxu0
        %v1560 = vadd.f32 0.0, %v1559
        %v1561 = vpop.f32.mrb[0].mxu0
        %v1562 = vpop.f32.mrb[0].mxu0
        %v1563 = vpop.f32.mrb[0].mxu0
        %1564 = vdwg.mxu0
        %1566 = vrot.lane.b32.xlu0 %v1468, 16
        %v1567 = vpop.permute.xlu0 %1566
        %1570 = vrot.lane.b32.xlu0 %v1514, 32
        %v1571 = vpop.permute.xlu0 %1570
        %1574 = vrot.lane.b32.xlu0 %v1560, 48
        %v1575 = vpop.permute.xlu0 %1574
        %v1577 = vsel %vm1128, %v1422, %v1567
        %vm1578 = vcmask 261120
        %v1579 = vsel %vm1578, %v1577, %v1571
        %v1580 = vsel %vm884, %v1579, %v1575
        %v1581 = vpack.c.bf16 %v1580, %v1580
        %v1582 = vld [vmem:[%s724] sm:$0xf]
        %v1583 = vld [vmem:[%s724 + $0x4] sm:$0xf]
        %v1584 = vld [vmem:[%s724 + $0x8] sm:$0xf]
        %v1585 = vld [vmem:[%s724 + $0xc] sm:$0xf]
        %v1586 = vld [vmem:[%s724 + $0x10] sm:$0xf]
        %v1587 = vld [vmem:[%s724 + $0x14] sm:$0xf]
        %v1588 = vld [vmem:[%s724 + $0x18] sm:$0xf]
        %v1589 = vld [vmem:[%s724 + $0x1c] sm:$0xf]
        %v1598 = vunpack.c.l.b16 %v1582
        %v1599 = vunpack.c.l.b16 %v1583
        %v1600 = vunpack.c.l.b16 %v1584
        %v1601 = vunpack.c.l.b16 %v1585
        %v1602 = vunpack.c.l.b16 %v1586
        %v1603 = vunpack.c.l.b16 %v1587
        %v1604 = vunpack.c.l.b16 %v1588
        %v1605 = vunpack.c.l.b16 %v1589
        %v1606 = vpack.c.b16 %v1599, %v1598
        %v1607 = vpack.c.b16 %v1601, %v1600
        %v1608 = vpack.c.b16 %v1603, %v1602
        %v1609 = vpack.c.b16 %v1605, %v1604
        %vm1614 = vcmask 523264
        %v1616 = vsel %vm1614, %v1581, 0
        %1618 = vmatprep.subr.bf16.mxu0 0
        %1619 = vmatpush1.bf16.msra.mxu0 %v1606
        %1620 = vmatprep.subr.bf16.mxu0 0
        %1621 = vmatpush1.bf16.msra.mxu0 %v1607
        %1622 = vmatprep.subr.bf16.mxu0 0
        %1623 = vmatpush1.bf16.msra.mxu0 %v1608
        %1624 = vmatprep.subr.bf16.mxu0 0
        %1625 = vmatpush1.bf16.msra.mxu0 %v1609
        %1626 = vmatprep.subr.bf16.mxu0 0
        %1627 = vmatpush1.bf16.msra.mxu0 0
        %1628 = vmatprep.subr.bf16.mxu0 0
        %1629 = vmatpush1.bf16.msra.mxu0 0
        %1630 = vmatprep.subr.bf16.mxu0 0
        %1631 = vmatpush1.bf16.msra.mxu0 0
        %1632 = vmatprep.subr.bf16.mxu0 0
        %1633 = vmatpush1.bf16.msra.mxu0 0
        %1634 = vmatprep.subr.bf16.mxu0 0
        %1635 = vmatpush1.bf16.msra.mxu0 0
        %1636 = vmatprep.subr.bf16.mxu0 0
        %1637 = vmatpush1.bf16.msra.mxu0 0
        %1638 = vmatprep.subr.bf16.mxu0 0
        %1639 = vmatpush1.bf16.msra.mxu0 0
        %1640 = vmatprep.subr.bf16.mxu0 0
        %1641 = vmatpush1.bf16.msra.mxu0 0
        %1642 = vmatprep.subr.bf16.mxu0 0
        %1643 = vmatpush1.bf16.msra.mxu0 0
        %1644 = vmatprep.subr.bf16.mxu0 0
        %1645 = vmatpush1.bf16.msra.mxu0 0
        %1646 = vmatprep.subr.bf16.mxu0 0
        %1647 = vmatpush1.bf16.msra.mxu0 0
        %1648 = vmatprep.subr.bf16.mxu0 0
        %1649 = vmatpush1.bf16.msra.mxu0 0
        %1650 = vmatprep.mubr.bf16.mxu0 0
        %1651 = vmatmul.mubr.bf16.gmra.mrb[0].mxu0 %v1616
        %v1652 = vpop.f32.mrb[0].mxu0
        %v1653 = vadd.f32 %v881, %v1652
        %v1654 = vpop.f32.mrb[0].mxu0
        %v1655 = vpop.f32.mrb[0].mxu0
        %v1656 = vpop.f32.mrb[0].mxu0
        %1657 = vdwg.mxu0
        %v1658 = vld [vmem:[%s732] sm:$0x1]
        %v1659 = vmul.f32 %v1653, %v1653
        %v1660 = vsel %vm884, %v1659, 0.0
        %1661 = vadd.xlane.f32.xlu0 %v1660
        %v1662 = vpop.xlane.xlu0 %1661
        %v1663 = vmul.f32 %v1662, %v888
        %v1664 = vadd.f32 %v1663, 1.1920929e-07
        %v1665 = vrsqrt.pop %v1664
        %v1666 = vmul.f32 %v1653, %v1665
        %v1668 = vlaneseq
        %v1669 = vshrl.u32 %v1668, 7
        %v1670 = vsub.s32 0, %v1669
        %v1671 = vrot.slane %v1658, %v1670
        %v1673 = vmul.f32 %v1666, %v1671
        %v1674 = vpack.c.bf16 %v1673, %v1673
        %v1675 = vld [vmem:[%s741] sm:$0xf]
        %v1676 = vld [vmem:[%s741 + $0x4] sm:$0xf]
        %v1677 = vld [vmem:[%s741 + $0x8] sm:$0xf]
        %v1678 = vld [vmem:[%s741 + $0xc] sm:$0xf]
        %v1679 = vld [vmem:[%s741 + $0x10] sm:$0xf]
        %v1680 = vld [vmem:[%s741 + $0x14] sm:$0xf]
        %v1681 = vld [vmem:[%s749] sm:$0x1]
        %v1683 = vlaneseq
        %v1684 = vshrl.u32 %v1683, 7
        %v1685 = vsub.s32 0, %v1684
        %v1686 = vrot.slane %v1681, %v1685
        %v1694 = vunpack.c.l.b16 %v1675
        %v1695 = vunpack.c.l.b16 %v1676
        %v1696 = vunpack.c.l.b16 %v1677
        %v1697 = vunpack.c.l.b16 %v1678
        %v1698 = vunpack.c.l.b16 %v1679
        %v1699 = vunpack.c.l.b16 %v1680
        %v1700 = vpack.c.b16 %v1695, %v1694
        %v1701 = vpack.c.b16 %v1697, %v1696
        %v1702 = vpack.c.b16 %v1699, %v1698
        %v1707 = vsel %vm884, %v1674, 0
        %1709 = vmatprep.subr.bf16.mxu0 0
        %1710 = vmatpush1.bf16.msra.mxu0 %v1700
        %1711 = vmatprep.subr.bf16.mxu0 0
        %1712 = vmatpush1.bf16.msra.mxu0 %v1701
        %1713 = vmatprep.subr.bf16.mxu0 0
        %1714 = vmatpush1.bf16.msra.mxu0 %v1702
        %1715 = vmatprep.subr.bf16.mxu0 0
        %1716 = vmatpush1.bf16.msra.mxu0 0
        %1717 = vmatprep.subr.bf16.mxu0 0
        %1718 = vmatpush1.bf16.msra.mxu0 0
        %1719 = vmatprep.subr.bf16.mxu0 0
        %1720 = vmatpush1.bf16.msra.mxu0 0
        %1721 = vmatprep.subr.bf16.mxu0 0
        %1722 = vmatpush1.bf16.msra.mxu0 0
        %1723 = vmatprep.subr.bf16.mxu0 0
        %1724 = vmatpush1.bf16.msra.mxu0 0
        %1725 = vmatprep.subr.bf16.mxu0 0
        %1726 = vmatpush1.bf16.msra.mxu0 0
        %1727 = vmatprep.subr.bf16.mxu0 0
        %1728 = vmatpush1.bf16.msra.mxu0 0
        %1729 = vmatprep.subr.bf16.mxu0 0
        %1730 = vmatpush1.bf16.msra.mxu0 0
        %1731 = vmatprep.subr.bf16.mxu0 0
        %1732 = vmatpush1.bf16.msra.mxu0 0
        %1733 = vmatprep.subr.bf16.mxu0 0
        %1734 = vmatpush1.bf16.msra.mxu0 0
        %1735 = vmatprep.subr.bf16.mxu0 0
        %1736 = vmatpush1.bf16.msra.mxu0 0
        %1737 = vmatprep.subr.bf16.mxu0 0
        %1738 = vmatpush1.bf16.msra.mxu0 0
        %1739 = vmatprep.subr.bf16.mxu0 0
        %1740 = vmatpush1.bf16.msra.mxu0 0
        %1741 = vmatprep.mubr.bf16.mxu0 0
        %1742 = vmatmul.mubr.bf16.gmra.mrb[0].mxu0 %v1707
        %v1743 = vpop.f32.mrb[0].mxu0
        %v1744 = vadd.f32 %v1686, %v1743
        %v1745 = vpop.f32.mrb[0].mxu0
        %v1746 = vpop.f32.mrb[0].mxu0
        %v1747 = vpop.f32.mrb[0].mxu0
        %1748 = vdwg.mxu0
        %v1749 = vld [vmem:[%s758] sm:$0xf]
        %v1750 = vld [vmem:[%s758 + $0x4] sm:$0xf]
        %v1751 = vld [vmem:[%s758 + $0x8] sm:$0xf]
        %v1752 = vld [vmem:[%s758 + $0xc] sm:$0xf]
        %v1753 = vld [vmem:[%s758 + $0x10] sm:$0xf]
        %v1754 = vld [vmem:[%s758 + $0x14] sm:$0xf]
        %v1755 = vld [vmem:[%s766] sm:$0x1]
        %v1757 = vlaneseq
        %v1758 = vshrl.u32 %v1757, 7
        %v1759 = vsub.s32 0, %v1758
        %v1760 = vrot.slane %v1755, %v1759
        %v1768 = vunpack.c.l.b16 %v1749
        %v1769 = vunpack.c.l.b16 %v1750
        %v1770 = vunpack.c.l.b16 %v1751
        %v1771 = vunpack.c.l.b16 %v1752
        %v1772 = vunpack.c.l.b16 %v1753
        %v1773 = vunpack.c.l.b16 %v1754
        %v1774 = vpack.c.b16 %v1769, %v1768
        %v1775 = vpack.c.b16 %v1771, %v1770
        %v1776 = vpack.c.b16 %v1773, %v1772
        %1780 = vmatprep.subr.bf16.mxu0 0
        %1781 = vmatpush1.bf16.msra.mxu0 %v1774
        %1782 = vmatprep.subr.bf16.mxu0 0
        %1783 = vmatpush1.bf16.msra.mxu0 %v1775
        %1784 = vmatprep.subr.bf16.mxu0 0
        %1785 = vmatpush1.bf16.msra.mxu0 %v1776
        %1786 = vmatprep.subr.bf16.mxu0 0
        %1787 = vmatpush1.bf16.msra.mxu0 0
        %1788 = vmatprep.subr.bf16.mxu0 0
        %1789 = vmatpush1.bf16.msra.mxu0 0
        %1790 = vmatprep.subr.bf16.mxu0 0
        %1791 = vmatpush1.bf16.msra.mxu0 0
        %1792 = vmatprep.subr.bf16.mxu0 0
        %1793 = vmatpush1.bf16.msra.mxu0 0
        %1794 = vmatprep.subr.bf16.mxu0 0
        %1795 = vmatpush1.bf16.msra.mxu0 0
        %1796 = vmatprep.subr.bf16.mxu0 0
        %1797 = vmatpush1.bf16.msra.mxu0 0
        %1798 = vmatprep.subr.bf16.mxu0 0
        %1799 = vmatpush1.bf16.msra.mxu0 0
        %1800 = vmatprep.subr.bf16.mxu0 0
        %1801 = vmatpush1.bf16.msra.mxu0 0
        %1802 = vmatprep.subr.bf16.mxu0 0
        %1803 = vmatpush1.bf16.msra.mxu0 0
        %1804 = vmatprep.subr.bf16.mxu0 0
        %1805 = vmatpush1.bf16.msra.mxu0 0
        %1806 = vmatprep.subr.bf16.mxu0 0
        %1807 = vmatpush1.bf16.msra.mxu0 0
        %1808 = vmatprep.subr.bf16.mxu0 0
        %1809 = vmatpush1.bf16.msra.mxu0 0
        %1810 = vmatprep.subr.bf16.mxu0 0
        %1811 = vmatpush1.bf16.msra.mxu0 0
        %1812 = vmatprep.mubr.bf16.mxu0 0
        %1813 = vmatmul.mubr.bf16.gmra.mrb[0].mxu0 %v1707
        %v1814 = vpop.f32.mrb[0].mxu0
        %v1815 = vadd.f32 %v1760, %v1814
        %v1816 = vpop.f32.mrb[0].mxu0
        %v1817 = vpop.f32.mrb[0].mxu0
        %v1818 = vpop.f32.mrb[0].mxu0
        %1819 = vdwg.mxu0
        %v1820 = vmul.f32 %v1815, %v1815
        %v1821 = vmul.f32 %v1815, %v1820
        %v1822 = vmul.f32 %v1821, 0.044715
        %v1823 = vadd.f32 %v1815, %v1822
        %v1824 = vmul.f32 %v1823, 0.7978846
        %v1825 = vtanh.pop %v1824
        %v1826 = vadd.f32 %v1825, 1.0
        %v1827 = vmul.f32 %v1826, 0.5
        %v1828 = vmul.f32 %v1815, %v1827
        %v1829 = vmul.f32 %v1828, %v1744
        %v1830 = vpack.c.bf16 %v1829, %v1829
        %v1831 = vld [vmem:[%s775] sm:$0xf]
        %v1832 = vld [vmem:[%s775 + $0x4] sm:$0xf]
        %v1833 = vld [vmem:[%s775 + $0x8] sm:$0xf]
        %v1834 = vld [vmem:[%s775 + $0xc] sm:$0xf]
        %v1835 = vld [vmem:[%s775 + $0x10] sm:$0xf]
        %v1836 = vld [vmem:[%s775 + $0x14] sm:$0xf]
        %v1837 = vld [vmem:[%s775 + $0x18] sm:$0xf]
        %v1838 = vld [vmem:[%s775 + $0x1c] sm:$0xf]
        %v1839 = vld [vmem:[%s775 + $0x20] sm:$0xf]
        %v1840 = vld [vmem:[%s775 + $0x24] sm:$0xf]
        %v1841 = vld [vmem:[%s775 + $0x28] sm:$0xf]
        %v1842 = vld [vmem:[%s775 + $0x2c] sm:$0xf]
        %v1843 = vld [vmem:[%s775 + $0x30] sm:$0xf]
        %v1844 = vld [vmem:[%s775 + $0x34] sm:$0xf]
        %v1845 = vld [vmem:[%s775 + $0x38] sm:$0xf]
        %v1846 = vld [vmem:[%s775 + $0x3c] sm:$0xf]
        %v1847 = vld [vmem:[%s783] sm:$0x1]
        %v1849 = vlaneseq
        %v1850 = vshrl.u32 %v1849, 7
        %v1851 = vsub.s32 0, %v1850
        %v1852 = vrot.slane %v1847, %v1851
        %v1870 = vunpack.c.l.b16 %v1831
        %v1871 = vunpack.c.l.b16 %v1832
        %v1872 = vunpack.c.l.b16 %v1833
        %v1873 = vunpack.c.l.b16 %v1834
        %v1874 = vunpack.c.l.b16 %v1835
        %v1875 = vunpack.c.l.b16 %v1836
        %v1876 = vunpack.c.l.b16 %v1837
        %v1877 = vunpack.c.l.b16 %v1838
        %v1878 = vunpack.c.l.b16 %v1839
        %v1879 = vunpack.c.l.b16 %v1840
        %v1880 = vunpack.c.l.b16 %v1841
        %v1881 = vunpack.c.l.b16 %v1842
        %v1882 = vunpack.c.l.b16 %v1843
        %v1883 = vunpack.c.l.b16 %v1844
        %v1884 = vunpack.c.l.b16 %v1845
        %v1885 = vunpack.c.l.b16 %v1846
        %v1886 = vpack.c.b16 %v1871, %v1870
        %v1887 = vpack.c.b16 %v1873, %v1872
        %v1888 = vpack.c.b16 %v1875, %v1874
        %v1889 = vpack.c.b16 %v1877, %v1876
        %v1890 = vpack.c.b16 %v1879, %v1878
        %v1891 = vpack.c.b16 %v1881, %v1880
        %v1892 = vpack.c.b16 %v1883, %v1882
        %v1893 = vpack.c.b16 %v1885, %v1884
        %1902 = vmatprep.subr.bf16.mxu0 0
        %1903 = vmatpush1.bf16.msra.mxu0 %v1886
        %1904 = vmatprep.subr.bf16.mxu0 0
        %1905 = vmatpush1.bf16.msra.mxu0 %v1887
        %1906 = vmatprep.subr.bf16.mxu0 0
        %1907 = vmatpush1.bf16.msra.mxu0 %v1888
        %1908 = vmatprep.subr.bf16.mxu0 0
        %1909 = vmatpush1.bf16.msra.mxu0 %v1889
        %1910 = vmatprep.subr.bf16.mxu0 0
        %1911 = vmatpush1.bf16.msra.mxu0 %v1890
        %1912 = vmatprep.subr.bf16.mxu0 0
        %1913 = vmatpush1.bf16.msra.mxu0 %v1891
        %1914 = vmatprep.subr.bf16.mxu0 0
        %1915 = vmatpush1.bf16.msra.mxu0 %v1892
        %1916 = vmatprep.subr.bf16.mxu0 0
        %1917 = vmatpush1.bf16.msra.mxu0 %v1893
        %1918 = vmatprep.subr.bf16.mxu0 0
        %1919 = vmatpush1.bf16.msra.mxu0 0
        %1920 = vmatprep.subr.bf16.mxu0 0
        %1921 = vmatpush1.bf16.msra.mxu0 0
        %1922 = vmatprep.subr.bf16.mxu0 0
        %1923 = vmatpush1.bf16.msra.mxu0 0
        %1924 = vmatprep.subr.bf16.mxu0 0
        %1925 = vmatpush1.bf16.msra.mxu0 0
        %1926 = vmatprep.subr.bf16.mxu0 0
        %1927 = vmatpush1.bf16.msra.mxu0 0
        %1928 = vmatprep.subr.bf16.mxu0 0
        %1929 = vmatpush1.bf16.msra.mxu0 0
        %1930 = vmatprep.subr.bf16.mxu0 0
        %1931 = vmatpush1.bf16.msra.mxu0 0
        %1932 = vmatprep.subr.bf16.mxu0 0
        %1933 = vmatpush1.bf16.msra.mxu0 0
        %1934 = vmatprep.mubr.bf16.mxu0 0
        %1935 = vmatmul.mubr.bf16.gmra.mrb[0].mxu0 %v1830
        %v1936 = vpop.f32.mrb[0].mxu0
        %v1937 = vadd.f32 %v1852, %v1936
        %v1938 = vpop.f32.mrb[0].mxu0
        %v1939 = vpop.f32.mrb[0].mxu0
        %v1940 = vpop.f32.mrb[0].mxu0
        %1941 = vdwg.mxu0
        %v1942 = vadd.f32 %v1937, %v1653
        %1943 = vst.msk [vmem:[%s872] sm:$0xff] %vm884, %v1942
        %p1944 = scmp.eq.s32.totalorder %s38, 1
        // Predicated region
        $region137: #{tpu_custom_call.1} parent=75 // pred_check
          %p1945 = pneg %p1944
        $region138: #{tpu_custom_call.1} parent=75 // pred_check_branch
          %1947 = sbr.rel (%p1945) target = $region140
        $region139: #{tpu_custom_call.1} parent=75 // pred_region
          %v1948 = vld [vmem:[#allocation8] sm:$0x1]
          %v1949 = vmul.f32 %v1942, %v1942
          %v1950 = vsel %vm884, %v1949, 0.0
          %1951 = vadd.xlane.f32.xlu0 %v1950
          %v1952 = vpop.xlane.xlu0 %1951
          %v1953 = vmul.f32 %v1952, %v888
          %v1954 = vadd.f32 %v1953, 1.1920929e-07
          %v1955 = vrsqrt.pop %v1954
          %v1956 = vmul.f32 %v1942, %v1955
          %v1958 = vlaneseq
          %v1959 = vshrl.u32 %v1958, 7
          %v1960 = vsub.s32 0, %v1959
          %v1961 = vrot.slane %v1948, %v1960
          %v1963 = vmul.f32 %v1956, %v1961
          %1964 = vst.msk [vmem:[%s872] sm:$0xff] %vm884, %v1963
        $region140: #{tpu_custom_call.1} parent=75 // pred_fallthru
          _
        %s1965 = sand.u32 %s402, 1
        %s1966 = scalar_lea.sflag [#allocation4], %s1965
        %s1967 = sand.u32 %s402, 1
        %s1968 = smul.addr %s1967, 8
        %s1969 = scalar_lea.vmem [#allocation20], %s1968
        // Predicated region
        $region141: #{tpu_custom_call.1} parent=75 // pred_check
          %p1970 = pneg %p412
        $region142: #{tpu_custom_call.1} parent=75 // pred_check_branch
          %1972 = sbr.rel (%p1970) target = $region144
        $region143: #{tpu_custom_call.1} parent=75 // pred_region
          %s1974 = ssub.s32 128, 128
          %1975 = vsyncadd %s1966, %s1974
          %s1976 = smul.addr %s37, 128
          %s1977 = scalar_lea.hbm %s14, %s1976
          %s1979 = sshll.u32 %s1969, 4
          %s1980 = int_to_ptr.vmem [resolvable:$true] %s1979
          %1982 = dma.vmem_to_hbm [thread:$0]  %s1980, 128, %s1977, %s1966
        $region144: #{tpu_custom_call.1} parent=75 // pred_fallthru
          _
      $region76: #{tpu_custom_call.1} parent=5 // pred_fallthru
        _
      %p1983 = scmp.le.s32.totalorder 2, %s28
      // Predicated region
      $region145: #{tpu_custom_call.1} parent=5 // pred_check
        %p1984 = pneg %p1983
      $region146: #{tpu_custom_call.1} parent=5 // pred_check_branch
        %1986 = sbr.rel (%p1984) target = $region148
      $region147: #{tpu_custom_call.1} parent=5 // pred_region
        %s1987 = ssub.s32 %s28, 2
        // Predicated region
        $region149: #{tpu_custom_call.1} parent=147 // pred_check
          %p1988 = pneg %p418
        $region150: #{tpu_custom_call.1} parent=147 // pred_check_branch
          %1990 = sbr.rel (%p1988) target = $region152
        $region151: #{tpu_custom_call.1} parent=147 // pred_region
          %s1991 = sand.u32 %s403, 1
          %s1992 = scalar_lea.sflag [#allocation4], %s1991
          %s1993 = sand.u32 %s403, 1
          %s1994 = smul.addr %s1993, 8
          %s1995 = scalar_lea.vmem [#allocation20], %s1994
          %1996 = dma.done %s1992, 128
        $region152: #{tpu_custom_call.1} parent=147 // pred_fallthru
          _
      $region148: #{tpu_custom_call.1} parent=5 // pred_fallthru
        _
    $region6: #{tpu_custom_call.1} parent=1 // loop_footer
      %s32 = sadd.s32 1, %s28
    $region7: #{tpu_custom_call.1} parent=1 // loop_footer_branch
      %27 = sbr.rel target = $region3
    $region8: #{tpu_custom_call.1} parent=1 // loop_exit
      _
    %1997 = vsyncpa [#allocation3], 1
    %s1998 = scalar_lea.sflag [#allocation3], 1
    %1999 = vsyncpa %s1998, 1
    %2000 = vsyncpa [#allocation6], 1
    %2001 = vsyncpa [#allocation9], 1
    %2002 = vsyncpa [#allocation4], 1
    %s2003 = scalar_lea.sflag [#allocation4], 1
    %2004 = vsyncpa %s2003, 1

</llo_original>
